<compile_context>
chip_gen: v5e
topology: v5e:2x2
jax: 0.10.0
libtpu: 0.0.40
codegen_flags: <defaults>
</compile_context>

<pallas_src>
import functools

import jax
import jax.numpy as jnp
import numpy as np
from jax import lax
from jax.experimental import pallas as pl
from jax.experimental.pallas import tpu as pltpu


# ----------------------------------------------------------------------------
# Fused kernel: one grid step per "super batch" of b_blk batch items.
# ----------------------------------------------------------------------------
def resnet_block_kernel(x_ref, mask_ref, ss_ref, w1_ref, w2_ref, wres_ref,
                        cp_ref, g_ref, gt_ref, o_ref, *, b_blk, t_len, groups):
    f32 = jnp.float32
    bf16 = jnp.bfloat16
    C_out = o_ref.shape[1]
    T = t_len
    W = b_blk * T
    inv_n = 1.0 / float((C_out // groups) * T)      # GroupNorm 1/N (static)

    cp = cp_ref[...]          # (C_out, 8) f32 : [b1, g1, be1, b2, g2, be2, b_res, 0]
    g = g_ref[...]            # (G, C_out) one-hot group matrix
    gt = gt_ref[...]          # (C_out, G) its transpose

    # ---- pack b_blk batch items along the lane axis: b_blk x (C, T) -> (C, W) bf16
    x_pk = jnp.concatenate([x_ref[b] for b in range(b_blk)], axis=1)     # unmasked
    m_pk = jnp.concatenate([mask_ref[b] for b in range(b_blk)], axis=1)  # (1, W)
    xm_pk = x_pk * m_pk                                                  # masked conv input

    # ---- hoisted lane / position masks (built once, reused by both blocks)
    pos_t = lax.broadcasted_iota(jnp.int32, (1, T), 1)
    pos = jnp.concatenate([pos_t] * b_blk, axis=1)                       # position within chunk
    ok_prev = pos != 0                                                   # t-1 stays in chunk
    ok_next = pos != (T - 1)                                             # t+1 stays in chunk
    lane2 = lax.broadcasted_iota(jnp.int32, (1, 2), 1)

    def conv3(z_bf, w_ref, bias):
        # 3-tap conv as three (C_out,C)x(C,W) bf16 MXU matmuls on the SAME operand;
        # the time shift is applied AFTER the contraction with pltpu.roll, and the
        # batch-chunk edges are re-zeroed (== conv1d padding=1 per batch item).
        y_m1 = jnp.dot(w_ref[0], z_bf, preferred_element_type=f32)   # tap x[t-1]
        y_0 = jnp.dot(w_ref[1], z_bf, preferred_element_type=f32)    # tap x[t]
        y_p1 = jnp.dot(w_ref[2], z_bf, preferred_element_type=f32)   # tap x[t+1]
        y = (y_0
             + jnp.where(ok_prev, pltpu.roll(y_m1, shift=1, axis=1), 0.0)
             + jnp.where(ok_next, pltpu.roll(y_p1, shift=W - 1, axis=1), 0.0))
        return y + bias

    def gn_affine_silu(yb, gamma, beta, scale, shift, mask_b):
        # GroupNorm (biased var, eps=1e-5) on one batch item's (C_out, T) chunk:
        # exact f32 lane reductions + two tiny one-hot matmuls; fused channel affine.
        s1 = jnp.sum(yb, axis=-1, keepdims=True)                     # (C_out, 1)
        s2 = jnp.sum(yb * yb, axis=-1, keepdims=True)                # (C_out, 1)
        s = jnp.where(lane2 == 0, s1, s2)                            # (C_out, 2)
        mv = jnp.dot(gt, jnp.dot(g, s, preferred_element_type=f32),
                     preferred_element_type=f32) * inv_n             # (C_out, 2)
        mean = mv[:, 0:1]
        var = jnp.maximum(mv[:, 1:2] - mean * mean, 0.0)             # clamp >= 0
        a = lax.rsqrt(var + 1e-5) * gamma
        c = beta - mean * a
        if scale is not None:                                        # time-emb scale/shift
            a = a * (scale + 1.0)
            c = c * (scale + 1.0) + shift
        z = yb * a + c
        z = z * jax.nn.sigmoid(z)                                    # SiLU
        return z * mask_b

    # ---- block 1 (with time-embedding scale/shift) -------------------------
    y1 = conv3(xm_pk, w1_ref, cp[:, 0:1])
    h_chunks = []
    for b in range(b_blk):
        ssb = ss_ref[b]                                              # (C_out, 2)
        hb = gn_affine_silu(y1[:, b * T:(b + 1) * T],
                            cp[:, 1:2], cp[:, 2:3],
                            ssb[:, 0:1], ssb[:, 1:2], mask_ref[b])
        h_chunks.append(hb.astype(bf16))                             # bf16 before the concat
    h_bf = jnp.concatenate(h_chunks, axis=1)                         # (C_out, W), already masked

    # ---- block 2 (input already masked -> no redundant *mask) --------------
    y2 = conv3(h_bf, w2_ref, cp[:, 3:4])

    # ---- 1x1 residual conv on the ORIGINAL (unmasked) input, fused with add+store
    res = jnp.dot(wres_ref[...], x_pk, preferred_element_type=f32) + cp[:, 6:7]

    for b in range(b_blk):
        ob = gn_affine_silu(y2[:, b * T:(b + 1) * T],
                            cp[:, 4:5], cp[:, 5:6], None, None, mask_ref[b])
        o_ref[b] = (ob + res[:, b * T:(b + 1) * T]).astype(o_ref.dtype)


# ----------------------------------------------------------------------------
# Plain-JAX glue: weight standardization, parameter packing, BlockSpecs.
# ----------------------------------------------------------------------------
def weight_standardize(w, eps=1e-5):
    # w: (C_out, C_in, K); torch.std is unbiased (ddof=1); eps=1e-5 for float32.
    mean = jnp.mean(w, axis=(1, 2), keepdims=True)
    std = jnp.std(w, axis=(1, 2), keepdims=True, ddof=1)
    return (w - mean) / (std + eps)


def _pick_batch_pack(B, T):
    # Pack batch items along the lane axis until the matmul N dim reaches >=256
    # (fills the 256-wide MXU on v6e/v7x, amortizes per-grid-step overhead).
    b_blk = 1
    while (B % (b_blk * 2) == 0) and (b_blk * T < 256) and (T % 128 == 0):
        b_blk *= 2
    return b_blk


def resnet_block_forward(x, mask, time_emb, params, *, groups):
    B, C_in, T = x.shape
    C_out = params["b1"].shape[0]
    f32, bf16 = jnp.float32, jnp.bfloat16
    assert C_in % 8 == 0 and C_out % 8 == 0 and C_out % groups == 0

    b_blk = _pick_batch_pack(B, T)
    S = B // b_blk

    # --- activations stream as bf16 (halves HBM traffic); in-kernel math stays f32
    x_bf = x.astype(bf16)
    mask_bf = mask.astype(bf16)

    # --- conv weights: standardized, tap-major (3, C_out, C), bf16 -----------
    def ws3(w):
        return jnp.transpose(weight_standardize(w), (2, 0, 1)).astype(bf16)

    w1 = ws3(params["w1"])                                    # (3, C_out, C_in)
    w2 = ws3(params["w2"])                                    # (3, C_out, C_out)
    wres = params["w_res"].astype(bf16)                       # (C_out, C_in)

    cp = jnp.stack([params["b1"], params["gamma1"], params["beta1"],
                    params["b2"], params["gamma2"], params["beta2"],
                    params["b_res"], jnp.zeros((C_out,), f32)], axis=-1)  # (C_out, 8)

    # time MLP (SiLU + Linear) for the whole batch in one dense XLA GEMM
    t = time_emb * jax.nn.sigmoid(time_emb)
    ssf = t @ params["mlp_w"].T + params["mlp_b"]             # (B, 2*C_out)
    ss = jnp.stack([ssf[:, :C_out], ssf[:, C_out:]], axis=-1).astype(f32)  # (B, C_out, 2)

    cpg = C_out // groups
    gmat = (jnp.arange(C_out)[None, :] // cpg
            == jnp.arange(groups)[:, None]).astype(f32)       # (G, C_out)
    gmat_t = gmat.T                                           # (C_out, G)

    def streamed(shape):
        return pl.BlockSpec(shape, lambda s: (s,) + (0,) * (len(shape) - 1))

    def resident(shape):
        # Grid-invariant parameters: single-buffered (index_map is constant, so a
        # second pipeline buffer would only waste VMEM).
        idx = lambda s: (0,) * len(shape)
        try:
            return pl.BlockSpec(shape, idx, pipeline_mode=pl.Buffered(1))
        except (TypeError, AttributeError):   # older API without pipeline_mode
            return pl.BlockSpec(shape, idx)

    # --- explicit VMEM budget (generation-safe: >= 32 MiB, <= v7x's 64 MiB) ---
    blk_bytes = (
        2 * (b_blk * C_in * T * 2 + b_blk * T * 2 + b_blk * C_out * 2 * 4
             + b_blk * C_out * T * 2)                                # double-buffered streams
        + (3 * C_out * C_in + 3 * C_out * C_out + C_out * C_in) * 2  # resident weights (bf16)
        + C_out * 8 * 4 + 2 * groups * C_out * 4                     # resident params
        + 12 * C_out * b_blk * T * 4 + 2 * C_in * b_blk * T * 2)     # live intermediates
    vmem_limit = int(min(max(2 * blk_bytes, 32 * 1024 * 1024), 64 * 1024 * 1024))

    flops = 2 * B * T * C_out * (3 * C_in + 3 * C_out + C_in)
    bytes_accessed = (x_bf.size * 2 + mask_bf.size * 2 + ss.size * 4
                      + (w1.size + w2.size + wres.size) * 2 + cp.size * 4
                      + 2 * groups * C_out * 4 + B * C_out * T * 2)
    cost = pl.CostEstimate(flops=flops, transcendentals=2 * B * C_out * T,
                           bytes_accessed=bytes_accessed)

    kernel = functools.partial(resnet_block_kernel,
                               b_blk=b_blk, t_len=T, groups=groups)

    return pl.pallas_call(
        kernel,
        out_shape=jax.ShapeDtypeStruct((B, C_out, T), bf16),
        grid=(S,),
        in_specs=[
            streamed((b_blk, C_in, T)),      # x (bf16, unmasked; halo handled in-kernel)
            streamed((b_blk, 1, T)),         # mask (bf16)
            streamed((b_blk, C_out, 2)),     # precomputed [scale, shift] per batch item
            resident((3, C_out, C_in)),      # standardized conv1 weight (bf16, tap-major)
            resident((3, C_out, C_out)),     # standardized conv2 weight (bf16, tap-major)
            resident((C_out, C_in)),         # 1x1 residual conv weight (bf16)
            resident((C_out, 8)),            # packed per-channel params (f32)
            resident((groups, C_out)),       # group one-hot
            resident((C_out, groups)),       # its transpose
        ],
        out_specs=streamed((b_blk, C_out, T)),
        compiler_params=pltpu.CompilerParams(
            dimension_semantics=("parallel",),
            vmem_limit_bytes=vmem_limit),
        cost_estimate=cost,
    )(x_bf, mask_bf, ss, w1, w2, wres, cp, gmat, gmat_t)


# ----------------------------------------------------------------------------
# Pure-JAX reference (mirrors the PyTorch module) for a correctness check.
# ----------------------------------------------------------------------------
def ref_forward(x, mask, time_emb, params, *, groups):
    def block(xi, wk, b, gamma, beta, scale_shift=None):
        wn = weight_standardize(wk)
        xm = xi * mask
        y = lax.conv_general_dilated(
            xm, wn, window_strides=(1,), padding=[(1, 1)],
            dimension_numbers=("NCH", "OIH", "NCH"))
        y = y + b[None, :, None]
        B, C, T = y.shape
        yg = y.reshape(B, groups, C // groups, T)
        mean = yg.mean(axis=(2, 3), keepdims=True)
        var = yg.var(axis=(2, 3), keepdims=True)
        yg = (yg - mean) / jnp.sqrt(var + 1e-5)
        y = yg.reshape(B, C, T) * gamma[None, :, None] + beta[None, :, None]
        if scale_shift is not None:
            sc, sh = scale_shift
            y = y * (sc + 1.0) + sh
        y = y * jax.nn.sigmoid(y)
        return y * mask

    C_out = params["b1"].shape[0]
    t = time_emb * jax.nn.sigmoid(time_emb)
    ss = t @ params["mlp_w"].T + params["mlp_b"]          # (B, 2*C_out)
    ss = ss[:, :, None]
    scale, shift = ss[:, :C_out], ss[:, C_out:]

    h = block(x, params["w1"], params["b1"], params["gamma1"], params["beta1"],
              scale_shift=(scale, shift))
    h = block(h, params["w2"], params["b2"], params["gamma2"], params["beta2"])
    res = jnp.einsum("oc,bct->bot", params["w_res"], x) + params["b_res"][None, :, None]
    return h + res


def init_params(key, dim, dim_out, E):
    ks = jax.random.split(key, 12)
    f32 = jnp.float32
    return {
        "w1": 0.3 * jax.random.normal(ks[0], (dim_out, dim, 3), f32),
        "b1": 0.1 * jax.random.normal(ks[1], (dim_out,), f32),
        "gamma1": 1.0 + 0.1 * jax.random.normal(ks[2], (dim_out,), f32),
        "beta1": 0.1 * jax.random.normal(ks[3], (dim_out,), f32),
        "w2": 0.3 * jax.random.normal(ks[4], (dim_out, dim_out, 3), f32),
        "b2": 0.1 * jax.random.normal(ks[5], (dim_out,), f32),
        "gamma2": 1.0 + 0.1 * jax.random.normal(ks[6], (dim_out,), f32),
        "beta2": 0.1 * jax.random.normal(ks[7], (dim_out,), f32),
        "mlp_w": 0.2 * jax.random.normal(ks[8], (2 * dim_out, E), f32),
        "mlp_b": 0.1 * jax.random.normal(ks[9], (2 * dim_out,), f32),
        "w_res": 0.3 * jax.random.normal(ks[10], (dim_out, dim), f32),
        "b_res": 0.1 * jax.random.normal(ks[11], (dim_out,), f32),
    }


if __name__ == "__main__":
    # T multiple of 128 (lane-dense stores, aligned batch packing); channels mult. of 8.
    B, dim, dim_out, T, E, groups = 2, 8, 16, 128, 32, 8

    key = jax.random.PRNGKey(0)
    kx, kt, kp = jax.random.split(key, 3)

    x = jax.random.normal(kx, (B, dim, T), jnp.float32)
    lengths = jnp.array([T, T - 32])
    mask = (jnp.arange(T)[None, :] < lengths[:, None]).astype(jnp.float32)[:, None, :]
    time_emb = jax.random.normal(kt, (B, E), jnp.float32)
    params = init_params(kp, dim, dim_out, E)

    out = resnet_block_forward(x, mask, time_emb, params, groups=groups)
    out = jax.block_until_ready(out)

    ref = jax.block_until_ready(ref_forward(x, mask, time_emb, params, groups=groups))
    assert out.shape == (B, dim_out, T)

    out_np = np.asarray(jax.device_get(out)).astype(np.float32)
    ref_np = np.asarray(jax.device_get(ref)).astype(np.float32)
    assert np.all(np.isfinite(out_np))
    # bf16 I/O + bf16 MXU operands with f32 accumulation -> loose tolerance vs pure-f32 ref
    assert np.allclose(out_np, ref_np, atol=8e-2, rtol=5e-2)

    print("KERNEL_OK")
</pallas_src>

<mosaic_0001>
module attributes {stable_mosaic.version = 11 : i64} {
  func.func @resnet_block_kernel(%arg0: i32, %arg1: memref<2x8x128xbf16, #tpu.memory_space<vmem>>, %arg2: memref<2x1x128xbf16, #tpu.memory_space<vmem>>, %arg3: memref<2x16x2xf32, #tpu.memory_space<vmem>>, %arg4: memref<3x16x8xbf16, #tpu.memory_space<vmem>>, %arg5: memref<3x16x16xbf16, #tpu.memory_space<vmem>>, %arg6: memref<16x8xbf16, #tpu.memory_space<vmem>>, %arg7: memref<16x8xf32, #tpu.memory_space<vmem>>, %arg8: memref<8x16xf32, #tpu.memory_space<vmem>>, %arg9: memref<16x8xf32, #tpu.memory_space<vmem>>, %arg10: memref<2x16x128xbf16, #tpu.memory_space<vmem>>) attributes {dimension_semantics = [#tpu.dimension_semantics<parallel>], iteration_bounds = array<i64: 1>, scalar_prefetch = 0 : i64, scratch_operands = 0 : i64, tpu.core_type = #tpu.core_type<tc>, window_params = [{transform_indices = @transform_0, window_bounds = array<i64: 2, 8, 128>}, {transform_indices = @transform_1, window_bounds = array<i64: 2, 1, 128>}, {transform_indices = @transform_2, window_bounds = array<i64: 2, 16, 2>}, {pipeline_mode = #tpu.pipeline_mode<synchronous>, transform_indices = @transform_3, window_bounds = array<i64: 3, 16, 8>}, {pipeline_mode = #tpu.pipeline_mode<synchronous>, transform_indices = @transform_4, window_bounds = array<i64: 3, 16, 16>}, {pipeline_mode = #tpu.pipeline_mode<synchronous>, transform_indices = @transform_5, window_bounds = array<i64: 16, 8>}, {pipeline_mode = #tpu.pipeline_mode<synchronous>, transform_indices = @transform_6, window_bounds = array<i64: 16, 8>}, {pipeline_mode = #tpu.pipeline_mode<synchronous>, transform_indices = @transform_7, window_bounds = array<i64: 8, 16>}, {pipeline_mode = #tpu.pipeline_mode<synchronous>, transform_indices = @transform_8, window_bounds = array<i64: 16, 8>}, {transform_indices = @transform_9, window_bounds = array<i64: 2, 16, 128>}]} {
    %c0 = arith.constant 0 : index
    %c0_0 = arith.constant 0 : index
    %0 = vector.load %arg7[%c0, %c0_0] : memref<16x8xf32, #tpu.memory_space<vmem>>, vector<16x8xf32>
    %c0_1 = arith.constant 0 : index
    %c0_2 = arith.constant 0 : index
    %1 = vector.load %arg8[%c0_1, %c0_2] : memref<8x16xf32, #tpu.memory_space<vmem>>, vector<8x16xf32>
    %c0_3 = arith.constant 0 : index
    %c0_4 = arith.constant 0 : index
    %2 = vector.load %arg9[%c0_3, %c0_4] : memref<16x8xf32, #tpu.memory_space<vmem>>, vector<16x8xf32>
    %c0_5 = arith.constant 0 : index
    %c0_6 = arith.constant 0 : index
    %c0_7 = arith.constant 0 : index
    %3 = vector.load %arg1[%c0_5, %c0_6, %c0_7] : memref<2x8x128xbf16, #tpu.memory_space<vmem>>, vector<1x8x128xbf16>
    %4 = vector.shape_cast %3 : vector<1x8x128xbf16> to vector<8x128xbf16>
    %c1 = arith.constant 1 : index
    %c0_8 = arith.constant 0 : index
    %c0_9 = arith.constant 0 : index
    %5 = vector.load %arg1[%c1, %c0_8, %c0_9] : memref<2x8x128xbf16, #tpu.memory_space<vmem>>, vector<1x8x128xbf16>
    %6 = vector.shape_cast %5 : vector<1x8x128xbf16> to vector<8x128xbf16>
    %7 = tpu.concatenate %4, %6 in 1 : vector<8x128xbf16>, vector<8x128xbf16> -> vector<8x256xbf16>
    %c0_10 = arith.constant 0 : index
    %c0_11 = arith.constant 0 : index
    %c0_12 = arith.constant 0 : index
    %8 = vector.load %arg2[%c0_10, %c0_11, %c0_12] : memref<2x1x128xbf16, #tpu.memory_space<vmem>>, vector<1x1x128xbf16>
    %9 = vector.shape_cast %8 : vector<1x1x128xbf16> to vector<1x128xbf16>
    %c1_13 = arith.constant 1 : index
    %c0_14 = arith.constant 0 : index
    %c0_15 = arith.constant 0 : index
    %10 = vector.load %arg2[%c1_13, %c0_14, %c0_15] : memref<2x1x128xbf16, #tpu.memory_space<vmem>>, vector<1x1x128xbf16>
    %11 = vector.shape_cast %10 : vector<1x1x128xbf16> to vector<1x128xbf16>
    %12 = tpu.concatenate %9, %11 in 1 : vector<1x128xbf16>, vector<1x128xbf16> -> vector<1x256xbf16>
    %13 = vector.broadcast %12 : vector<1x256xbf16> to vector<8x256xbf16>
    %14 = arith.mulf %7, %13 : vector<8x256xbf16>
    %15 = tpu.iota {dimensions = array<i32: 1>} : vector<1x128xi32>
    %16 = tpu.concatenate %15, %15 in 1 : vector<1x128xi32>, vector<1x128xi32> -> vector<1x256xi32>
    %c0_i32 = arith.constant 0 : i32
    %17 = vector.broadcast %c0_i32 : i32 to vector<1x256xi32>
    %18 = arith.cmpi ne, %16, %17 : vector<1x256xi32>
    %c127_i32 = arith.constant 127 : i32
    %19 = vector.broadcast %c127_i32 : i32 to vector<1x256xi32>
    %20 = arith.cmpi ne, %16, %19 : vector<1x256xi32>
    %21 = tpu.iota {dimensions = array<i32: 1>} : vector<1x2xi32>
    %22 = vector.extract_strided_slice %0 {offsets = [0, 0], sizes = [16, 1], strides = [1, 1]} : vector<16x8xf32> to vector<16x1xf32>
    %c0_16 = arith.constant 0 : index
    %c0_17 = arith.constant 0 : index
    %c0_18 = arith.constant 0 : index
    %23 = vector.load %arg4[%c0_16, %c0_17, %c0_18] : memref<3x16x8xbf16, #tpu.memory_space<vmem>>, vector<1x16x8xbf16>
    %24 = vector.shape_cast %23 : vector<1x16x8xbf16> to vector<16x8xbf16>
    %cst = arith.constant dense<0.000000e+00> : vector<16x256xf32>
    %25 = tpu.matmul %24, %14, %cst {dimension_numbers = #tpu.dot_dimension_numbers<[1], [0], [0], [1], [0, 0, 1, 1], [], []>} : vector<16x8xbf16>, vector<8x256xbf16>, vector<16x256xf32> -> vector<16x256xf32>
    %c1_19 = arith.constant 1 : index
    %c0_20 = arith.constant 0 : index
    %c0_21 = arith.constant 0 : index
    %26 = vector.load %arg4[%c1_19, %c0_20, %c0_21] : memref<3x16x8xbf16, #tpu.memory_space<vmem>>, vector<1x16x8xbf16>
    %27 = vector.shape_cast %26 : vector<1x16x8xbf16> to vector<16x8xbf16>
    %cst_22 = arith.constant dense<0.000000e+00> : vector<16x256xf32>
    %28 = tpu.matmul %27, %14, %cst_22 {dimension_numbers = #tpu.dot_dimension_numbers<[1], [0], [0], [1], [0, 0, 1, 1], [], []>} : vector<16x8xbf16>, vector<8x256xbf16>, vector<16x256xf32> -> vector<16x256xf32>
    %c2 = arith.constant 2 : index
    %c0_23 = arith.constant 0 : index
    %c0_24 = arith.constant 0 : index
    %29 = vector.load %arg4[%c2, %c0_23, %c0_24] : memref<3x16x8xbf16, #tpu.memory_space<vmem>>, vector<1x16x8xbf16>
    %30 = vector.shape_cast %29 : vector<1x16x8xbf16> to vector<16x8xbf16>
    %cst_25 = arith.constant dense<0.000000e+00> : vector<16x256xf32>
    %31 = tpu.matmul %30, %14, %cst_25 {dimension_numbers = #tpu.dot_dimension_numbers<[1], [0], [0], [1], [0, 0, 1, 1], [], []>} : vector<16x8xbf16>, vector<8x256xbf16>, vector<16x256xf32> -> vector<16x256xf32>
    %c1_i32 = arith.constant 1 : i32
    %32 = tpu.dynamic_rotate %25 by %c1_i32 dim 1 : vector<16x256xf32>, i32 -> vector<16x256xf32>
    %cst_26 = arith.constant 0.000000e+00 : f32
    %33 = vector.shape_cast %18 : vector<1x256xi1> to vector<1x256xi1>
    %34 = vector.broadcast %33 : vector<1x256xi1> to vector<16x256xi1>
    %35 = vector.broadcast %cst_26 : f32 to vector<16x256xf32>
    %36 = arith.select %34, %32, %35 : vector<16x256xi1>, vector<16x256xf32>
    %37 = arith.addf %28, %36 : vector<16x256xf32>
    %c255_i32 = arith.constant 255 : i32
    %38 = tpu.dynamic_rotate %31 by %c255_i32 dim 1 : vector<16x256xf32>, i32 -> vector<16x256xf32>
    %cst_27 = arith.constant 0.000000e+00 : f32
    %39 = vector.shape_cast %20 : vector<1x256xi1> to vector<1x256xi1>
    %40 = vector.broadcast %39 : vector<1x256xi1> to vector<16x256xi1>
    %41 = vector.broadcast %cst_27 : f32 to vector<16x256xf32>
    %42 = arith.select %40, %38, %41 : vector<16x256xi1>, vector<16x256xf32>
    %43 = arith.addf %37, %42 : vector<16x256xf32>
    %44 = vector.broadcast %22 : vector<16x1xf32> to vector<16x256xf32>
    %45 = arith.addf %43, %44 : vector<16x256xf32>
    %c0_28 = arith.constant 0 : index
    %c0_29 = arith.constant 0 : index
    %c0_30 = arith.constant 0 : index
    %46 = vector.load %arg3[%c0_28, %c0_29, %c0_30] : memref<2x16x2xf32, #tpu.memory_space<vmem>>, vector<1x16x2xf32>
    %47 = vector.shape_cast %46 : vector<1x16x2xf32> to vector<16x2xf32>
    %48 = vector.extract_strided_slice %45 {offsets = [0, 0], sizes = [16, 128], strides = [1, 1]} : vector<16x256xf32> to vector<16x128xf32>
    %49 = vector.extract_strided_slice %0 {offsets = [0, 1], sizes = [16, 1], strides = [1, 1]} : vector<16x8xf32> to vector<16x1xf32>
    %50 = vector.extract_strided_slice %0 {offsets = [0, 2], sizes = [16, 1], strides = [1, 1]} : vector<16x8xf32> to vector<16x1xf32>
    %51 = vector.extract_strided_slice %47 {offsets = [0, 0], sizes = [16, 1], strides = [1, 1]} : vector<16x2xf32> to vector<16x1xf32>
    %52 = vector.extract_strided_slice %47 {offsets = [0, 1], sizes = [16, 1], strides = [1, 1]} : vector<16x2xf32> to vector<16x1xf32>
    %c0_31 = arith.constant 0 : index
    %c0_32 = arith.constant 0 : index
    %c0_33 = arith.constant 0 : index
    %53 = vector.load %arg2[%c0_31, %c0_32, %c0_33] : memref<2x1x128xbf16, #tpu.memory_space<vmem>>, vector<1x1x128xbf16>
    %54 = vector.shape_cast %53 : vector<1x1x128xbf16> to vector<1x128xbf16>
    %cst_34 = arith.constant dense<0.000000e+00> : vector<16xf32>
    %55 = vector.multi_reduction <add>, %48, %cst_34 [1] : vector<16x128xf32> to vector<16xf32>
    %56 = vector.shape_cast %55 : vector<16xf32> to vector<16x1xf32>
    %57 = arith.mulf %48, %48 : vector<16x128xf32>
    %cst_35 = arith.constant dense<0.000000e+00> : vector<16xf32>
    %58 = vector.multi_reduction <add>, %57, %cst_35 [1] : vector<16x128xf32> to vector<16xf32>
    %59 = vector.shape_cast %58 : vector<16xf32> to vector<16x1xf32>
    %c0_i32_36 = arith.constant 0 : i32
    %60 = vector.broadcast %c0_i32_36 : i32 to vector<1x2xi32>
    %61 = arith.cmpi eq, %21, %60 : vector<1x2xi32>
    %62 = vector.shape_cast %61 : vector<1x2xi1> to vector<1x2xi1>
    %63 = vector.broadcast %62 : vector<1x2xi1> to vector<16x2xi1>
    %64 = vector.shape_cast %56 : vector<16x1xf32> to vector<16x1xf32>
    %65 = vector.broadcast %64 : vector<16x1xf32> to vector<16x2xf32>
    %66 = vector.shape_cast %59 : vector<16x1xf32> to vector<16x1xf32>
    %67 = vector.broadcast %66 : vector<16x1xf32> to vector<16x2xf32>
    %68 = arith.select %63, %65, %67 : vector<16x2xi1>, vector<16x2xf32>
    %cst_37 = arith.constant dense<0.000000e+00> : vector<8x2xf32>
    %69 = tpu.matmul %1, %68, %cst_37 {dimension_numbers = #tpu.dot_dimension_numbers<[1], [0], [0], [1], [0, 0, 1, 1], [], []>} : vector<8x16xf32>, vector<16x2xf32>, vector<8x2xf32> -> vector<8x2xf32>
    %cst_38 = arith.constant dense<0.000000e+00> : vector<16x2xf32>
    %70 = tpu.matmul %2, %69, %cst_38 {dimension_numbers = #tpu.dot_dimension_numbers<[1], [0], [0], [1], [0, 0, 1, 1], [], []>} : vector<16x8xf32>, vector<8x2xf32>, vector<16x2xf32> -> vector<16x2xf32>
    %cst_39 = arith.constant 3.906250e-03 : f32
    %71 = vector.broadcast %cst_39 : f32 to vector<16x2xf32>
    %72 = arith.mulf %70, %71 : vector<16x2xf32>
    %73 = vector.extract_strided_slice %72 {offsets = [0, 0], sizes = [16, 1], strides = [1, 1]} : vector<16x2xf32> to vector<16x1xf32>
    %74 = vector.extract_strided_slice %72 {offsets = [0, 1], sizes = [16, 1], strides = [1, 1]} : vector<16x2xf32> to vector<16x1xf32>
    %75 = arith.mulf %73, %73 : vector<16x1xf32>
    %76 = arith.subf %74, %75 : vector<16x1xf32>
    %cst_40 = arith.constant 0.000000e+00 : f32
    %77 = vector.broadcast %cst_40 : f32 to vector<16x1xf32>
    %78 = arith.maximumf %76, %77 : vector<16x1xf32>
    %cst_41 = arith.constant 9.99999974E-6 : f32
    %79 = vector.broadcast %cst_41 : f32 to vector<16x1xf32>
    %80 = arith.addf %78, %79 : vector<16x1xf32>
    %81 = math.rsqrt %80 : vector<16x1xf32>
    %82 = arith.mulf %81, %49 : vector<16x1xf32>
    %83 = arith.mulf %73, %82 : vector<16x1xf32>
    %84 = arith.subf %50, %83 : vector<16x1xf32>
    %cst_42 = arith.constant 1.000000e+00 : f32
    %85 = vector.broadcast %cst_42 : f32 to vector<16x1xf32>
    %86 = arith.addf %51, %85 : vector<16x1xf32>
    %87 = arith.mulf %82, %86 : vector<16x1xf32>
    %cst_43 = arith.constant 1.000000e+00 : f32
    %88 = vector.broadcast %cst_43 : f32 to vector<16x1xf32>
    %89 = arith.addf %51, %88 : vector<16x1xf32>
    %90 = arith.mulf %84, %89 : vector<16x1xf32>
    %91 = arith.addf %90, %52 : vector<16x1xf32>
    %92 = vector.broadcast %87 : vector<16x1xf32> to vector<16x128xf32>
    %93 = arith.mulf %48, %92 : vector<16x128xf32>
    %94 = vector.broadcast %91 : vector<16x1xf32> to vector<16x128xf32>
    %95 = arith.addf %93, %94 : vector<16x128xf32>
    %96 = arith.negf %95 : vector<16x128xf32>
    %97 = math.exp %96 : vector<16x128xf32>
    %cst_44 = arith.constant 1.000000e+00 : f32
    %98 = vector.broadcast %cst_44 : f32 to vector<16x128xf32>
    %99 = arith.addf %98, %97 : vector<16x128xf32>
    %100 = arith.divf %98, %99 : vector<16x128xf32>
    %101 = arith.mulf %95, %100 : vector<16x128xf32>
    %102 = arith.extf %54 : vector<1x128xbf16> to vector<1x128xf32>
    %103 = vector.broadcast %102 : vector<1x128xf32> to vector<16x128xf32>
    %104 = arith.mulf %101, %103 : vector<16x128xf32>
    %105 = arith.truncf %104 : vector<16x128xf32> to vector<16x128xbf16>
    %c1_45 = arith.constant 1 : index
    %c0_46 = arith.constant 0 : index
    %c0_47 = arith.constant 0 : index
    %106 = vector.load %arg3[%c1_45, %c0_46, %c0_47] : memref<2x16x2xf32, #tpu.memory_space<vmem>>, vector<1x16x2xf32>
    %107 = vector.shape_cast %106 : vector<1x16x2xf32> to vector<16x2xf32>
    %108 = vector.extract_strided_slice %45 {offsets = [0, 128], sizes = [16, 128], strides = [1, 1]} : vector<16x256xf32> to vector<16x128xf32>
    %109 = vector.extract_strided_slice %0 {offsets = [0, 1], sizes = [16, 1], strides = [1, 1]} : vector<16x8xf32> to vector<16x1xf32>
    %110 = vector.extract_strided_slice %0 {offsets = [0, 2], sizes = [16, 1], strides = [1, 1]} : vector<16x8xf32> to vector<16x1xf32>
    %111 = vector.extract_strided_slice %107 {offsets = [0, 0], sizes = [16, 1], strides = [1, 1]} : vector<16x2xf32> to vector<16x1xf32>
    %112 = vector.extract_strided_slice %107 {offsets = [0, 1], sizes = [16, 1], strides = [1, 1]} : vector<16x2xf32> to vector<16x1xf32>
    %c1_48 = arith.constant 1 : index
    %c0_49 = arith.constant 0 : index
    %c0_50 = arith.constant 0 : index
    %113 = vector.load %arg2[%c1_48, %c0_49, %c0_50] : memref<2x1x128xbf16, #tpu.memory_space<vmem>>, vector<1x1x128xbf16>
    %114 = vector.shape_cast %113 : vector<1x1x128xbf16> to vector<1x128xbf16>
    %cst_51 = arith.constant dense<0.000000e+00> : vector<16xf32>
    %115 = vector.multi_reduction <add>, %108, %cst_51 [1] : vector<16x128xf32> to vector<16xf32>
    %116 = vector.shape_cast %115 : vector<16xf32> to vector<16x1xf32>
    %117 = arith.mulf %108, %108 : vector<16x128xf32>
    %cst_52 = arith.constant dense<0.000000e+00> : vector<16xf32>
    %118 = vector.multi_reduction <add>, %117, %cst_52 [1] : vector<16x128xf32> to vector<16xf32>
    %119 = vector.shape_cast %118 : vector<16xf32> to vector<16x1xf32>
    %c0_i32_53 = arith.constant 0 : i32
    %120 = vector.broadcast %c0_i32_53 : i32 to vector<1x2xi32>
    %121 = arith.cmpi eq, %21, %120 : vector<1x2xi32>
    %122 = vector.shape_cast %121 : vector<1x2xi1> to vector<1x2xi1>
    %123 = vector.broadcast %122 : vector<1x2xi1> to vector<16x2xi1>
    %124 = vector.shape_cast %116 : vector<16x1xf32> to vector<16x1xf32>
    %125 = vector.broadcast %124 : vector<16x1xf32> to vector<16x2xf32>
    %126 = vector.shape_cast %119 : vector<16x1xf32> to vector<16x1xf32>
    %127 = vector.broadcast %126 : vector<16x1xf32> to vector<16x2xf32>
    %128 = arith.select %123, %125, %127 : vector<16x2xi1>, vector<16x2xf32>
    %cst_54 = arith.constant dense<0.000000e+00> : vector<8x2xf32>
    %129 = tpu.matmul %1, %128, %cst_54 {dimension_numbers = #tpu.dot_dimension_numbers<[1], [0], [0], [1], [0, 0, 1, 1], [], []>} : vector<8x16xf32>, vector<16x2xf32>, vector<8x2xf32> -> vector<8x2xf32>
    %cst_55 = arith.constant dense<0.000000e+00> : vector<16x2xf32>
    %130 = tpu.matmul %2, %129, %cst_55 {dimension_numbers = #tpu.dot_dimension_numbers<[1], [0], [0], [1], [0, 0, 1, 1], [], []>} : vector<16x8xf32>, vector<8x2xf32>, vector<16x2xf32> -> vector<16x2xf32>
    %cst_56 = arith.constant 3.906250e-03 : f32
    %131 = vector.broadcast %cst_56 : f32 to vector<16x2xf32>
    %132 = arith.mulf %130, %131 : vector<16x2xf32>
    %133 = vector.extract_strided_slice %132 {offsets = [0, 0], sizes = [16, 1], strides = [1, 1]} : vector<16x2xf32> to vector<16x1xf32>
    %134 = vector.extract_strided_slice %132 {offsets = [0, 1], sizes = [16, 1], strides = [1, 1]} : vector<16x2xf32> to vector<16x1xf32>
    %135 = arith.mulf %133, %133 : vector<16x1xf32>
    %136 = arith.subf %134, %135 : vector<16x1xf32>
    %cst_57 = arith.constant 0.000000e+00 : f32
    %137 = vector.broadcast %cst_57 : f32 to vector<16x1xf32>
    %138 = arith.maximumf %136, %137 : vector<16x1xf32>
    %cst_58 = arith.constant 9.99999974E-6 : f32
    %139 = vector.broadcast %cst_58 : f32 to vector<16x1xf32>
    %140 = arith.addf %138, %139 : vector<16x1xf32>
    %141 = math.rsqrt %140 : vector<16x1xf32>
    %142 = arith.mulf %141, %109 : vector<16x1xf32>
    %143 = arith.mulf %133, %142 : vector<16x1xf32>
    %144 = arith.subf %110, %143 : vector<16x1xf32>
    %cst_59 = arith.constant 1.000000e+00 : f32
    %145 = vector.broadcast %cst_59 : f32 to vector<16x1xf32>
    %146 = arith.addf %111, %145 : vector<16x1xf32>
    %147 = arith.mulf %142, %146 : vector<16x1xf32>
    %cst_60 = arith.constant 1.000000e+00 : f32
    %148 = vector.broadcast %cst_60 : f32 to vector<16x1xf32>
    %149 = arith.addf %111, %148 : vector<16x1xf32>
    %150 = arith.mulf %144, %149 : vector<16x1xf32>
    %151 = arith.addf %150, %112 : vector<16x1xf32>
    %152 = vector.broadcast %147 : vector<16x1xf32> to vector<16x128xf32>
    %153 = arith.mulf %108, %152 : vector<16x128xf32>
    %154 = vector.broadcast %151 : vector<16x1xf32> to vector<16x128xf32>
    %155 = arith.addf %153, %154 : vector<16x128xf32>
    %156 = arith.negf %155 : vector<16x128xf32>
    %157 = math.exp %156 : vector<16x128xf32>
    %cst_61 = arith.constant 1.000000e+00 : f32
    %158 = vector.broadcast %cst_61 : f32 to vector<16x128xf32>
    %159 = arith.addf %158, %157 : vector<16x128xf32>
    %160 = arith.divf %158, %159 : vector<16x128xf32>
    %161 = arith.mulf %155, %160 : vector<16x128xf32>
    %162 = arith.extf %114 : vector<1x128xbf16> to vector<1x128xf32>
    %163 = vector.broadcast %162 : vector<1x128xf32> to vector<16x128xf32>
    %164 = arith.mulf %161, %163 : vector<16x128xf32>
    %165 = arith.truncf %164 : vector<16x128xf32> to vector<16x128xbf16>
    %166 = tpu.concatenate %105, %165 in 1 : vector<16x128xbf16>, vector<16x128xbf16> -> vector<16x256xbf16>
    %167 = vector.extract_strided_slice %0 {offsets = [0, 3], sizes = [16, 1], strides = [1, 1]} : vector<16x8xf32> to vector<16x1xf32>
    %c0_62 = arith.constant 0 : index
    %c0_63 = arith.constant 0 : index
    %c0_64 = arith.constant 0 : index
    %168 = vector.load %arg5[%c0_62, %c0_63, %c0_64] : memref<3x16x16xbf16, #tpu.memory_space<vmem>>, vector<1x16x16xbf16>
    %169 = vector.shape_cast %168 : vector<1x16x16xbf16> to vector<16x16xbf16>
    %cst_65 = arith.constant dense<0.000000e+00> : vector<16x256xf32>
    %170 = tpu.matmul %169, %166, %cst_65 {dimension_numbers = #tpu.dot_dimension_numbers<[1], [0], [0], [1], [0, 0, 1, 1], [], []>} : vector<16x16xbf16>, vector<16x256xbf16>, vector<16x256xf32> -> vector<16x256xf32>
    %c1_66 = arith.constant 1 : index
    %c0_67 = arith.constant 0 : index
    %c0_68 = arith.constant 0 : index
    %171 = vector.load %arg5[%c1_66, %c0_67, %c0_68] : memref<3x16x16xbf16, #tpu.memory_space<vmem>>, vector<1x16x16xbf16>
    %172 = vector.shape_cast %171 : vector<1x16x16xbf16> to vector<16x16xbf16>
    %cst_69 = arith.constant dense<0.000000e+00> : vector<16x256xf32>
    %173 = tpu.matmul %172, %166, %cst_69 {dimension_numbers = #tpu.dot_dimension_numbers<[1], [0], [0], [1], [0, 0, 1, 1], [], []>} : vector<16x16xbf16>, vector<16x256xbf16>, vector<16x256xf32> -> vector<16x256xf32>
    %c2_70 = arith.constant 2 : index
    %c0_71 = arith.constant 0 : index
    %c0_72 = arith.constant 0 : index
    %174 = vector.load %arg5[%c2_70, %c0_71, %c0_72] : memref<3x16x16xbf16, #tpu.memory_space<vmem>>, vector<1x16x16xbf16>
    %175 = vector.shape_cast %174 : vector<1x16x16xbf16> to vector<16x16xbf16>
    %cst_73 = arith.constant dense<0.000000e+00> : vector<16x256xf32>
    %176 = tpu.matmul %175, %166, %cst_73 {dimension_numbers = #tpu.dot_dimension_numbers<[1], [0], [0], [1], [0, 0, 1, 1], [], []>} : vector<16x16xbf16>, vector<16x256xbf16>, vector<16x256xf32> -> vector<16x256xf32>
    %c1_i32_74 = arith.constant 1 : i32
    %177 = tpu.dynamic_rotate %170 by %c1_i32_74 dim 1 : vector<16x256xf32>, i32 -> vector<16x256xf32>
    %cst_75 = arith.constant 0.000000e+00 : f32
    %178 = vector.shape_cast %18 : vector<1x256xi1> to vector<1x256xi1>
    %179 = vector.broadcast %178 : vector<1x256xi1> to vector<16x256xi1>
    %180 = vector.broadcast %cst_75 : f32 to vector<16x256xf32>
    %181 = arith.select %179, %177, %180 : vector<16x256xi1>, vector<16x256xf32>
    %182 = arith.addf %173, %181 : vector<16x256xf32>
    %c255_i32_76 = arith.constant 255 : i32
    %183 = tpu.dynamic_rotate %176 by %c255_i32_76 dim 1 : vector<16x256xf32>, i32 -> vector<16x256xf32>
    %cst_77 = arith.constant 0.000000e+00 : f32
    %184 = vector.shape_cast %20 : vector<1x256xi1> to vector<1x256xi1>
    %185 = vector.broadcast %184 : vector<1x256xi1> to vector<16x256xi1>
    %186 = vector.broadcast %cst_77 : f32 to vector<16x256xf32>
    %187 = arith.select %185, %183, %186 : vector<16x256xi1>, vector<16x256xf32>
    %188 = arith.addf %182, %187 : vector<16x256xf32>
    %189 = vector.broadcast %167 : vector<16x1xf32> to vector<16x256xf32>
    %190 = arith.addf %188, %189 : vector<16x256xf32>
    %c0_78 = arith.constant 0 : index
    %c0_79 = arith.constant 0 : index
    %191 = vector.load %arg6[%c0_78, %c0_79] : memref<16x8xbf16, #tpu.memory_space<vmem>>, vector<16x8xbf16>
    %cst_80 = arith.constant dense<0.000000e+00> : vector<16x256xf32>
    %192 = tpu.matmul %191, %7, %cst_80 {dimension_numbers = #tpu.dot_dimension_numbers<[1], [0], [0], [1], [0, 0, 1, 1], [], []>} : vector<16x8xbf16>, vector<8x256xbf16>, vector<16x256xf32> -> vector<16x256xf32>
    %193 = vector.extract_strided_slice %0 {offsets = [0, 6], sizes = [16, 1], strides = [1, 1]} : vector<16x8xf32> to vector<16x1xf32>
    %194 = vector.broadcast %193 : vector<16x1xf32> to vector<16x256xf32>
    %195 = arith.addf %192, %194 : vector<16x256xf32>
    %196 = vector.extract_strided_slice %190 {offsets = [0, 0], sizes = [16, 128], strides = [1, 1]} : vector<16x256xf32> to vector<16x128xf32>
    %197 = vector.extract_strided_slice %0 {offsets = [0, 4], sizes = [16, 1], strides = [1, 1]} : vector<16x8xf32> to vector<16x1xf32>
    %198 = vector.extract_strided_slice %0 {offsets = [0, 5], sizes = [16, 1], strides = [1, 1]} : vector<16x8xf32> to vector<16x1xf32>
    %c0_81 = arith.constant 0 : index
    %c0_82 = arith.constant 0 : index
    %c0_83 = arith.constant 0 : index
    %199 = vector.load %arg2[%c0_81, %c0_82, %c0_83] : memref<2x1x128xbf16, #tpu.memory_space<vmem>>, vector<1x1x128xbf16>
    %200 = vector.shape_cast %199 : vector<1x1x128xbf16> to vector<1x128xbf16>
    %cst_84 = arith.constant dense<0.000000e+00> : vector<16xf32>
    %201 = vector.multi_reduction <add>, %196, %cst_84 [1] : vector<16x128xf32> to vector<16xf32>
    %202 = vector.shape_cast %201 : vector<16xf32> to vector<16x1xf32>
    %203 = arith.mulf %196, %196 : vector<16x128xf32>
    %cst_85 = arith.constant dense<0.000000e+00> : vector<16xf32>
    %204 = vector.multi_reduction <add>, %203, %cst_85 [1] : vector<16x128xf32> to vector<16xf32>
    %205 = vector.shape_cast %204 : vector<16xf32> to vector<16x1xf32>
    %c0_i32_86 = arith.constant 0 : i32
    %206 = vector.broadcast %c0_i32_86 : i32 to vector<1x2xi32>
    %207 = arith.cmpi eq, %21, %206 : vector<1x2xi32>
    %208 = vector.shape_cast %207 : vector<1x2xi1> to vector<1x2xi1>
    %209 = vector.broadcast %208 : vector<1x2xi1> to vector<16x2xi1>
    %210 = vector.shape_cast %202 : vector<16x1xf32> to vector<16x1xf32>
    %211 = vector.broadcast %210 : vector<16x1xf32> to vector<16x2xf32>
    %212 = vector.shape_cast %205 : vector<16x1xf32> to vector<16x1xf32>
    %213 = vector.broadcast %212 : vector<16x1xf32> to vector<16x2xf32>
    %214 = arith.select %209, %211, %213 : vector<16x2xi1>, vector<16x2xf32>
    %cst_87 = arith.constant dense<0.000000e+00> : vector<8x2xf32>
    %215 = tpu.matmul %1, %214, %cst_87 {dimension_numbers = #tpu.dot_dimension_numbers<[1], [0], [0], [1], [0, 0, 1, 1], [], []>} : vector<8x16xf32>, vector<16x2xf32>, vector<8x2xf32> -> vector<8x2xf32>
    %cst_88 = arith.constant dense<0.000000e+00> : vector<16x2xf32>
    %216 = tpu.matmul %2, %215, %cst_88 {dimension_numbers = #tpu.dot_dimension_numbers<[1], [0], [0], [1], [0, 0, 1, 1], [], []>} : vector<16x8xf32>, vector<8x2xf32>, vector<16x2xf32> -> vector<16x2xf32>
    %cst_89 = arith.constant 3.906250e-03 : f32
    %217 = vector.broadcast %cst_89 : f32 to vector<16x2xf32>
    %218 = arith.mulf %216, %217 : vector<16x2xf32>
    %219 = vector.extract_strided_slice %218 {offsets = [0, 0], sizes = [16, 1], strides = [1, 1]} : vector<16x2xf32> to vector<16x1xf32>
    %220 = vector.extract_strided_slice %218 {offsets = [0, 1], sizes = [16, 1], strides = [1, 1]} : vector<16x2xf32> to vector<16x1xf32>
    %221 = arith.mulf %219, %219 : vector<16x1xf32>
    %222 = arith.subf %220, %221 : vector<16x1xf32>
    %cst_90 = arith.constant 0.000000e+00 : f32
    %223 = vector.broadcast %cst_90 : f32 to vector<16x1xf32>
    %224 = arith.maximumf %222, %223 : vector<16x1xf32>
    %cst_91 = arith.constant 9.99999974E-6 : f32
    %225 = vector.broadcast %cst_91 : f32 to vector<16x1xf32>
    %226 = arith.addf %224, %225 : vector<16x1xf32>
    %227 = math.rsqrt %226 : vector<16x1xf32>
    %228 = arith.mulf %227, %197 : vector<16x1xf32>
    %229 = arith.mulf %219, %228 : vector<16x1xf32>
    %230 = arith.subf %198, %229 : vector<16x1xf32>
    %231 = vector.broadcast %228 : vector<16x1xf32> to vector<16x128xf32>
    %232 = arith.mulf %196, %231 : vector<16x128xf32>
    %233 = vector.broadcast %230 : vector<16x1xf32> to vector<16x128xf32>
    %234 = arith.addf %232, %233 : vector<16x128xf32>
    %235 = arith.negf %234 : vector<16x128xf32>
    %236 = math.exp %235 : vector<16x128xf32>
    %cst_92 = arith.constant 1.000000e+00 : f32
    %237 = vector.broadcast %cst_92 : f32 to vector<16x128xf32>
    %238 = arith.addf %237, %236 : vector<16x128xf32>
    %239 = arith.divf %237, %238 : vector<16x128xf32>
    %240 = arith.mulf %234, %239 : vector<16x128xf32>
    %241 = arith.extf %200 : vector<1x128xbf16> to vector<1x128xf32>
    %242 = vector.broadcast %241 : vector<1x128xf32> to vector<16x128xf32>
    %243 = arith.mulf %240, %242 : vector<16x128xf32>
    %244 = vector.extract_strided_slice %195 {offsets = [0, 0], sizes = [16, 128], strides = [1, 1]} : vector<16x256xf32> to vector<16x128xf32>
    %245 = arith.addf %243, %244 : vector<16x128xf32>
    %246 = arith.truncf %245 : vector<16x128xf32> to vector<16x128xbf16>
    %c0_93 = arith.constant 0 : index
    %c0_94 = arith.constant 0 : index
    %c0_95 = arith.constant 0 : index
    %247 = vector.load %arg10[%c0_93, %c0_94, %c0_95] : memref<2x16x128xbf16, #tpu.memory_space<vmem>>, vector<1x16x128xbf16>
    %248 = vector.shape_cast %247 : vector<1x16x128xbf16> to vector<16x128xbf16>
    %249 = vector.shape_cast %246 : vector<16x128xbf16> to vector<1x16x128xbf16>
    tpu.vector_store %arg10[%c0_93, %c0_94, %c0_95], %249 {strides = array<i32>} : memref<2x16x128xbf16, #tpu.memory_space<vmem>>, vector<1x16x128xbf16>,
    %250 = vector.extract_strided_slice %190 {offsets = [0, 128], sizes = [16, 128], strides = [1, 1]} : vector<16x256xf32> to vector<16x128xf32>
    %251 = vector.extract_strided_slice %0 {offsets = [0, 4], sizes = [16, 1], strides = [1, 1]} : vector<16x8xf32> to vector<16x1xf32>
    %252 = vector.extract_strided_slice %0 {offsets = [0, 5], sizes = [16, 1], strides = [1, 1]} : vector<16x8xf32> to vector<16x1xf32>
    %c1_96 = arith.constant 1 : index
    %c0_97 = arith.constant 0 : index
    %c0_98 = arith.constant 0 : index
    %253 = vector.load %arg2[%c1_96, %c0_97, %c0_98] : memref<2x1x128xbf16, #tpu.memory_space<vmem>>, vector<1x1x128xbf16>
    %254 = vector.shape_cast %253 : vector<1x1x128xbf16> to vector<1x128xbf16>
    %cst_99 = arith.constant dense<0.000000e+00> : vector<16xf32>
    %255 = vector.multi_reduction <add>, %250, %cst_99 [1] : vector<16x128xf32> to vector<16xf32>
    %256 = vector.shape_cast %255 : vector<16xf32> to vector<16x1xf32>
    %257 = arith.mulf %250, %250 : vector<16x128xf32>
    %cst_100 = arith.constant dense<0.000000e+00> : vector<16xf32>
    %258 = vector.multi_reduction <add>, %257, %cst_100 [1] : vector<16x128xf32> to vector<16xf32>
    %259 = vector.shape_cast %258 : vector<16xf32> to vector<16x1xf32>
    %c0_i32_101 = arith.constant 0 : i32
    %260 = vector.broadcast %c0_i32_101 : i32 to vector<1x2xi32>
    %261 = arith.cmpi eq, %21, %260 : vector<1x2xi32>
    %262 = vector.shape_cast %261 : vector<1x2xi1> to vector<1x2xi1>
    %263 = vector.broadcast %262 : vector<1x2xi1> to vector<16x2xi1>
    %264 = vector.shape_cast %256 : vector<16x1xf32> to vector<16x1xf32>
    %265 = vector.broadcast %264 : vector<16x1xf32> to vector<16x2xf32>
    %266 = vector.shape_cast %259 : vector<16x1xf32> to vector<16x1xf32>
    %267 = vector.broadcast %266 : vector<16x1xf32> to vector<16x2xf32>
    %268 = arith.select %263, %265, %267 : vector<16x2xi1>, vector<16x2xf32>
    %cst_102 = arith.constant dense<0.000000e+00> : vector<8x2xf32>
    %269 = tpu.matmul %1, %268, %cst_102 {dimension_numbers = #tpu.dot_dimension_numbers<[1], [0], [0], [1], [0, 0, 1, 1], [], []>} : vector<8x16xf32>, vector<16x2xf32>, vector<8x2xf32> -> vector<8x2xf32>
    %cst_103 = arith.constant dense<0.000000e+00> : vector<16x2xf32>
    %270 = tpu.matmul %2, %269, %cst_103 {dimension_numbers = #tpu.dot_dimension_numbers<[1], [0], [0], [1], [0, 0, 1, 1], [], []>} : vector<16x8xf32>, vector<8x2xf32>, vector<16x2xf32> -> vector<16x2xf32>
    %cst_104 = arith.constant 3.906250e-03 : f32
    %271 = vector.broadcast %cst_104 : f32 to vector<16x2xf32>
    %272 = arith.mulf %270, %271 : vector<16x2xf32>
    %273 = vector.extract_strided_slice %272 {offsets = [0, 0], sizes = [16, 1], strides = [1, 1]} : vector<16x2xf32> to vector<16x1xf32>
    %274 = vector.extract_strided_slice %272 {offsets = [0, 1], sizes = [16, 1], strides = [1, 1]} : vector<16x2xf32> to vector<16x1xf32>
    %275 = arith.mulf %273, %273 : vector<16x1xf32>
    %276 = arith.subf %274, %275 : vector<16x1xf32>
    %cst_105 = arith.constant 0.000000e+00 : f32
    %277 = vector.broadcast %cst_105 : f32 to vector<16x1xf32>
    %278 = arith.maximumf %276, %277 : vector<16x1xf32>
    %cst_106 = arith.constant 9.99999974E-6 : f32
    %279 = vector.broadcast %cst_106 : f32 to vector<16x1xf32>
    %280 = arith.addf %278, %279 : vector<16x1xf32>
    %281 = math.rsqrt %280 : vector<16x1xf32>
    %282 = arith.mulf %281, %251 : vector<16x1xf32>
    %283 = arith.mulf %273, %282 : vector<16x1xf32>
    %284 = arith.subf %252, %283 : vector<16x1xf32>
    %285 = vector.broadcast %282 : vector<16x1xf32> to vector<16x128xf32>
    %286 = arith.mulf %250, %285 : vector<16x128xf32>
    %287 = vector.broadcast %284 : vector<16x1xf32> to vector<16x128xf32>
    %288 = arith.addf %286, %287 : vector<16x128xf32>
    %289 = arith.negf %288 : vector<16x128xf32>
    %290 = math.exp %289 : vector<16x128xf32>
    %cst_107 = arith.constant 1.000000e+00 : f32
    %291 = vector.broadcast %cst_107 : f32 to vector<16x128xf32>
    %292 = arith.addf %291, %290 : vector<16x128xf32>
    %293 = arith.divf %291, %292 : vector<16x128xf32>
    %294 = arith.mulf %288, %293 : vector<16x128xf32>
    %295 = arith.extf %254 : vector<1x128xbf16> to vector<1x128xf32>
    %296 = vector.broadcast %295 : vector<1x128xf32> to vector<16x128xf32>
    %297 = arith.mulf %294, %296 : vector<16x128xf32>
    %298 = vector.extract_strided_slice %195 {offsets = [0, 128], sizes = [16, 128], strides = [1, 1]} : vector<16x256xf32> to vector<16x128xf32>
    %299 = arith.addf %297, %298 : vector<16x128xf32>
    %300 = arith.truncf %299 : vector<16x128xf32> to vector<16x128xbf16>
    %c1_108 = arith.constant 1 : index
    %c0_109 = arith.constant 0 : index
    %c0_110 = arith.constant 0 : index
    %301 = vector.load %arg10[%c1_108, %c0_109, %c0_110] : memref<2x16x128xbf16, #tpu.memory_space<vmem>>, vector<1x16x128xbf16>
    %302 = vector.shape_cast %301 : vector<1x16x128xbf16> to vector<16x128xbf16>
    %303 = vector.shape_cast %300 : vector<16x128xbf16> to vector<1x16x128xbf16>
    tpu.vector_store %arg10[%c1_108, %c0_109, %c0_110], %303 {strides = array<i32>} : memref<2x16x128xbf16, #tpu.memory_space<vmem>>, vector<1x16x128xbf16>,
    return
  }
  func.func @transform_0(%arg0: i32) -> (i32, i32, i32) {
    %c0_i32 = arith.constant 0 : i32
    %c0_i32_0 = arith.constant 0 : i32
    %c0_i32_1 = arith.constant 0 : i32
    return %arg0, %c0_i32, %c0_i32_0 : i32, i32, i32
  }
  func.func @transform_1(%arg0: i32) -> (i32, i32, i32) {
    %c0_i32 = arith.constant 0 : i32
    %c0_i32_0 = arith.constant 0 : i32
    %c0_i32_1 = arith.constant 0 : i32
    return %arg0, %c0_i32, %c0_i32_0 : i32, i32, i32
  }
  func.func @transform_2(%arg0: i32) -> (i32, i32, i32) {
    %c0_i32 = arith.constant 0 : i32
    %c0_i32_0 = arith.constant 0 : i32
    %c0_i32_1 = arith.constant 0 : i32
    return %arg0, %c0_i32, %c0_i32_0 : i32, i32, i32
  }
  func.func @transform_3(%arg0: i32) -> (i32, i32, i32) {
    %c0_i32 = arith.constant 0 : i32
    %c0_i32_0 = arith.constant 0 : i32
    %c0_i32_1 = arith.constant 0 : i32
    %c0_i32_2 = arith.constant 0 : i32
    return %c0_i32, %c0_i32_0, %c0_i32_1 : i32, i32, i32
  }
  func.func @transform_4(%arg0: i32) -> (i32, i32, i32) {
    %c0_i32 = arith.constant 0 : i32
    %c0_i32_0 = arith.constant 0 : i32
    %c0_i32_1 = arith.constant 0 : i32
    %c0_i32_2 = arith.constant 0 : i32
    return %c0_i32, %c0_i32_0, %c0_i32_1 : i32, i32, i32
  }
  func.func @transform_5(%arg0: i32) -> (i32, i32) {
    %c0_i32 = arith.constant 0 : i32
    %c0_i32_0 = arith.constant 0 : i32
    %c0_i32_1 = arith.constant 0 : i32
    return %c0_i32, %c0_i32_0 : i32, i32
  }
  func.func @transform_6(%arg0: i32) -> (i32, i32) {
    %c0_i32 = arith.constant 0 : i32
    %c0_i32_0 = arith.constant 0 : i32
    %c0_i32_1 = arith.constant 0 : i32
    return %c0_i32, %c0_i32_0 : i32, i32
  }
  func.func @transform_7(%arg0: i32) -> (i32, i32) {
    %c0_i32 = arith.constant 0 : i32
    %c0_i32_0 = arith.constant 0 : i32
    %c0_i32_1 = arith.constant 0 : i32
    return %c0_i32, %c0_i32_0 : i32, i32
  }
  func.func @transform_8(%arg0: i32) -> (i32, i32) {
    %c0_i32 = arith.constant 0 : i32
    %c0_i32_0 = arith.constant 0 : i32
    %c0_i32_1 = arith.constant 0 : i32
    return %c0_i32, %c0_i32_0 : i32, i32
  }
  func.func @transform_9(%arg0: i32) -> (i32, i32, i32) {
    %c0_i32 = arith.constant 0 : i32
    %c0_i32_0 = arith.constant 0 : i32
    %c0_i32_1 = arith.constant 0 : i32
    return %arg0, %c0_i32, %c0_i32_0 : i32, i32, i32
  }
}

</mosaic_0001>

<llo_original>
// kernel: tpu_custom_call.1
$region0: #{tpu_custom_call.1}
  #allocation0 [shape = 'u32[]', space=smem, size = 0x4, offset = 0x4, fixed_abs, tag = 'smem constant byte address 0x4 - core index']
  #allocation1 [shape = 'u32[72,128]{1,0:T(1,128)}', space=vmem, size = 0x9000, scoped, tag = 'internal scratch']
  %s0 = inlined_call_operand.vmem [shape: bf16[2,8,128], index: 0, kind: input, shape index: {}]
  %s1 = inlined_call_operand.vmem [shape: bf16[2,1,128], index: 1, kind: input, shape index: {}]
  %s2 = inlined_call_operand.vmem [shape: f32[2,16,2], index: 2, kind: input, shape index: {}]
  %s3 = inlined_call_operand.vmem [shape: bf16[3,16,8], index: 3, kind: input, shape index: {}]
  %s4 = inlined_call_operand.vmem [shape: bf16[3,16,16], index: 4, kind: input, shape index: {}]
  %s5 = inlined_call_operand.vmem [shape: bf16[16,8], index: 5, kind: input, shape index: {}]
  %s6 = inlined_call_operand.vmem [shape: f32[16,8], index: 6, kind: input, shape index: {}]
  %s7 = inlined_call_operand.vmem [shape: f32[8,16], index: 7, kind: input, shape index: {}]
  %s8 = inlined_call_operand.vmem [shape: f32[16,8], index: 8, kind: input, shape index: {}]
  %s9 = inlined_call_operand.hbm [shape: bf16[2,16,128], index: 9, kind: output, shape index: {}]
  %s10 = sld [smem:[#allocation0]]
  $region46: #{tpu_custom_call.1} parent=0
    _
  %s12 = ssub.s32 1, %s10
  %s13 = scalar_select 0, %s12, %s10
  $region1: #{tpu_custom_call.1} parent=0
    #allocation2 [shape = 'u8[8192]{0}', space=vmem, size = 0x2000, scoped, tag = 'output window, operand 0, single buffered']
    #allocation3 [shape = 's32[1]{0}', space=sflag, size = 0x4, scoped, tag = 'scoped memory for tpu_custom_call.1']
    %14 = vsyncpa [#allocation3], 0
    // Predicated region
    $region2: #{tpu_custom_call.1} parent=1 // pred_check
      _
    $region3: #{tpu_custom_call.1} parent=1 // pred_check_branch
      %16 = sbr.rel (0) target = $region5
    $region4: #{tpu_custom_call.1} parent=1 // pred_region
      _
    $region5: #{tpu_custom_call.1} parent=1 // pred_fallthru
      _
    // Predicated region
    $region6: #{tpu_custom_call.1} parent=1 // pred_check
      _
    $region7: #{tpu_custom_call.1} parent=1 // pred_check_branch
      %18 = sbr.rel (0) target = $region9
    $region8: #{tpu_custom_call.1} parent=1 // pred_region
      _
    $region9: #{tpu_custom_call.1} parent=1 // pred_fallthru
      _
    // Predicated region
    $region10: #{tpu_custom_call.1} parent=1 // pred_check
      _
    $region11: #{tpu_custom_call.1} parent=1 // pred_check_branch
      %20 = sbr.rel (0) target = $region13
    $region12: #{tpu_custom_call.1} parent=1 // pred_region
      _
    $region13: #{tpu_custom_call.1} parent=1 // pred_fallthru
      _
    // Predicated region
    $region14: #{tpu_custom_call.1} parent=1 // pred_check
      _
    $region15: #{tpu_custom_call.1} parent=1 // pred_check_branch
      %22 = sbr.rel (0) target = $region17
    $region16: #{tpu_custom_call.1} parent=1 // pred_region
      _
    $region17: #{tpu_custom_call.1} parent=1 // pred_fallthru
      _
    // Predicated region
    $region18: #{tpu_custom_call.1} parent=1 // pred_check
      _
    $region19: #{tpu_custom_call.1} parent=1 // pred_check_branch
      %24 = sbr.rel (0) target = $region21
    $region20: #{tpu_custom_call.1} parent=1 // pred_region
      _
    $region21: #{tpu_custom_call.1} parent=1 // pred_fallthru
      _
    // Predicated region
    $region22: #{tpu_custom_call.1} parent=1 // pred_check
      _
    $region23: #{tpu_custom_call.1} parent=1 // pred_check_branch
      %26 = sbr.rel (0) target = $region25
    $region24: #{tpu_custom_call.1} parent=1 // pred_region
      _
    $region25: #{tpu_custom_call.1} parent=1 // pred_fallthru
      _
    // Predicated region
    $region26: #{tpu_custom_call.1} parent=1 // pred_check
      _
    $region27: #{tpu_custom_call.1} parent=1 // pred_check_branch
      %28 = sbr.rel (0) target = $region29
    $region28: #{tpu_custom_call.1} parent=1 // pred_region
      _
    $region29: #{tpu_custom_call.1} parent=1 // pred_fallthru
      _
    // Predicated region
    $region30: #{tpu_custom_call.1} parent=1 // pred_check
      _
    $region31: #{tpu_custom_call.1} parent=1 // pred_check_branch
      %30 = sbr.rel (0) target = $region33
    $region32: #{tpu_custom_call.1} parent=1 // pred_region
      _
    $region33: #{tpu_custom_call.1} parent=1 // pred_fallthru
      _
    // Predicated region
    $region34: #{tpu_custom_call.1} parent=1 // pred_check
      _
    $region35: #{tpu_custom_call.1} parent=1 // pred_check_branch
      %32 = sbr.rel (0) target = $region37
    $region36: #{tpu_custom_call.1} parent=1 // pred_region
      _
    $region37: #{tpu_custom_call.1} parent=1 // pred_fallthru
      _
    %v34 = vld [vmem:[%s6] sm:$0xff]
    %v35 = vld [vmem:[%s6 + $0x8] sm:$0xff]
    %v36 = vld [vmem:[%s7] sm:$0xff]
    %v37 = vld [vmem:[%s8] sm:$0xff]
    %v38 = vld [vmem:[%s8 + $0x8] sm:$0xff]
    %v39 = vld [vmem:[%s0] sm:$0xf]
    %s40 = scalar_lea.vmem %s0, 4
    %v41 = vld [vmem:[%s40] sm:$0xf]
    %v42 = vld [vmem:[%s1] sm:$0x1]
    %s43 = scalar_lea.vmem %s1, 1
    %v44 = vld [vmem:[%s43] sm:$0x1]
    %v46 = vpack.i.b16 %v42, %v42
    %v48 = vperm.slane %v46, 0
    %v50 = vpack.i.b16 %v44, %v44
    %v52 = vperm.slane %v50, 0
    %v53 = vunpack.c.l.bf16 %v39
    %v54 = vunpack.c.l.bf16 %v41
    %v55 = vunpack.c.l.bf16 %v48
    %v56 = vunpack.c.l.bf16 %v52
    %v57 = vmul.f32 %v53, %v55
    %v58 = vmul.f32 %v54, %v56
    %v59 = vpack.c.bf16 %v57, %v57
    %v60 = vpack.c.bf16 %v58, %v58
    %v61 = vlaneseq
    %v62 = vand.u32 %v61, 127
    %vm63 = vcmp.ne.s32.totalorder %v62, 0
    %vm64 = vcmp.ne.s32.totalorder %v62, 127
    %v65 = vld [vmem:[%s3] sm:$0xf]
    %v66 = vld [vmem:[%s3 + $0x4] sm:$0xf]
    %v69 = vunpack.c.l.b16 %v65
    %v70 = vunpack.c.l.b16 %v66
    %v71 = vpack.c.b16 %v70, %v69
    %vm72 = vcmask 64512
    %v74 = vsel %vm72, %v71, 0
    %vm76 = vcmask 1043456
    %v78 = vsel %vm76, %v59, 0
    %v81 = vsel %vm76, %v60, 0
    %83 = vmatpush.bf16.msra.mxu0 0
    %84 = vmatpush.bf16.msra.mxu0 0
    %85 = vmatpush.bf16.msra.mxu0 0
    %86 = vmatpush.bf16.msra.mxu0 0
    %87 = vmatpush.bf16.msra.mxu0 0
    %88 = vmatpush.bf16.msra.mxu0 0
    %89 = vmatpush.bf16.msra.mxu0 0
    %90 = vmatpush.bf16.msra.mxu0 %v78
    %91 = vmatmul.bf16.gmra.mxu0 %v74
    %v92 = vpop.f32.mrf.mxu0
    %v93 = vadd.f32 0.0, %v92
    %v94 = vpop.f32.mrf.mxu0
    %v95 = vadd.f32 0.0, %v94
    %96 = vdwg.mxu0
    %97 = vmatpush.bf16.msra.mxu0 0
    %98 = vmatpush.bf16.msra.mxu0 0
    %99 = vmatpush.bf16.msra.mxu0 0
    %100 = vmatpush.bf16.msra.mxu0 0
    %101 = vmatpush.bf16.msra.mxu0 0
    %102 = vmatpush.bf16.msra.mxu0 0
    %103 = vmatpush.bf16.msra.mxu0 0
    %104 = vmatpush.bf16.msra.mxu0 %v81
    %105 = vmatmul.bf16.gmra.mxu0 %v74
    %v106 = vpop.f32.mrf.mxu0
    %v107 = vadd.f32 0.0, %v106
    %v108 = vpop.f32.mrf.mxu0
    %v109 = vadd.f32 0.0, %v108
    %110 = vdwg.mxu0
    %s111 = scalar_lea.vmem %s3, 8
    %v112 = vld [vmem:[%s111] sm:$0xf]
    %v113 = vld [vmem:[%s111 + $0x4] sm:$0xf]
    %s114 = scalar_lea.vmem %s3, 16
    %v115 = vld [vmem:[%s114] sm:$0xf]
    %v116 = vld [vmem:[%s114 + $0x4] sm:$0xf]
    %v119 = vunpack.c.l.b16 %v115
    %v120 = vunpack.c.l.b16 %v116
    %v121 = vpack.c.b16 %v120, %v119
    %v123 = vsel %vm72, %v121, 0
    %125 = vmatpush.bf16.msra.mxu0 0
    %126 = vmatpush.bf16.msra.mxu0 0
    %127 = vmatpush.bf16.msra.mxu0 0
    %128 = vmatpush.bf16.msra.mxu0 0
    %129 = vmatpush.bf16.msra.mxu0 0
    %130 = vmatpush.bf16.msra.mxu0 0
    %131 = vmatpush.bf16.msra.mxu0 0
    %132 = vmatpush.bf16.msra.mxu0 %v78
    %133 = vmatmul.bf16.gmra.mxu0 %v123
    %v134 = vpop.f32.mrf.mxu0
    %v135 = vadd.f32 0.0, %v134
    %v136 = vpop.f32.mrf.mxu0
    %v137 = vadd.f32 0.0, %v136
    %138 = vdwg.mxu0
    %139 = vmatpush.bf16.msra.mxu0 0
    %140 = vmatpush.bf16.msra.mxu0 0
    %141 = vmatpush.bf16.msra.mxu0 0
    %142 = vmatpush.bf16.msra.mxu0 0
    %143 = vmatpush.bf16.msra.mxu0 0
    %144 = vmatpush.bf16.msra.mxu0 0
    %145 = vmatpush.bf16.msra.mxu0 0
    %146 = vmatpush.bf16.msra.mxu0 %v81
    %147 = vmatmul.bf16.gmra.mxu0 %v123
    %v148 = vpop.f32.mrf.mxu0
    %v149 = vadd.f32 0.0, %v148
    %v150 = vpop.f32.mrf.mxu0
    %v151 = vadd.f32 0.0, %v150
    %152 = vdwg.mxu0
    %153 = vrot.lane.b32.xlu0 %v93, 1
    %v154 = vpop.permute.xlu0 %153
    %155 = vrot.lane.b32.xlu0 %v95, 1
    %v156 = vpop.permute.xlu0 %155
    %157 = vrot.lane.b32.xlu0 %v107, 1
    %v158 = vpop.permute.xlu0 %157
    %159 = vrot.lane.b32.xlu0 %v109, 1
    %v160 = vpop.permute.xlu0 %159
    %vm161 = vcmp.lt.s32.totalorder %v62, 1
    %v162 = vsel %vm161, %v154, %v158
    %v163 = vsel %vm161, %v156, %v160
    %v164 = vsel %vm161, %v158, %v154
    %v165 = vsel %vm161, %v160, %v156
    %v166 = vsel %vm63, 1, 0
    %v167 = vperm.slane %v166, 0
    %vm168 = vcmp.eq.s32.totalorder %v167, 1
    %v169 = vsel %vm168, %v164, 0.0
    %v170 = vsel %vm168, %v162, 0.0
    %v171 = vsel %vm168, %v165, 0.0
    %v172 = vsel %vm168, %v163, 0.0
    %v175 = vunpack.c.l.b16 %v112
    %v176 = vunpack.c.l.b16 %v113
    %v177 = vpack.c.b16 %v176, %v175
    %v179 = vsel %vm72, %v177, 0
    %181 = vmatpush.bf16.msra.mxu0 0
    %182 = vmatpush.bf16.msra.mxu0 0
    %183 = vmatpush.bf16.msra.mxu0 0
    %184 = vmatpush.bf16.msra.mxu0 0
    %185 = vmatpush.bf16.msra.mxu0 0
    %186 = vmatpush.bf16.msra.mxu0 0
    %187 = vmatpush.bf16.msra.mxu0 0
    %188 = vmatpush.bf16.msra.mxu0 %v78
    %189 = vmatmul.bf16.gmra.mxu0 %v179
    %v190 = vpop.f32.mrf.mxu0
    %v191 = vadd.f32 %v169, %v190
    %v192 = vpop.f32.mrf.mxu0
    %v193 = vadd.f32 %v171, %v192
    %194 = vdwg.mxu0
    %195 = vmatpush.bf16.msra.mxu0 0
    %196 = vmatpush.bf16.msra.mxu0 0
    %197 = vmatpush.bf16.msra.mxu0 0
    %198 = vmatpush.bf16.msra.mxu0 0
    %199 = vmatpush.bf16.msra.mxu0 0
    %200 = vmatpush.bf16.msra.mxu0 0
    %201 = vmatpush.bf16.msra.mxu0 0
    %202 = vmatpush.bf16.msra.mxu0 %v81
    %203 = vmatmul.bf16.gmra.mxu0 %v179
    %v204 = vpop.f32.mrf.mxu0
    %v205 = vadd.f32 %v170, %v204
    %v206 = vpop.f32.mrf.mxu0
    %v207 = vadd.f32 %v172, %v206
    %208 = vdwg.mxu0
    %209 = vrot.lane.b32.xlu0 %v135, 127
    %v210 = vpop.permute.xlu0 %209
    %211 = vrot.lane.b32.xlu0 %v137, 127
    %v212 = vpop.permute.xlu0 %211
    %213 = vrot.lane.b32.xlu0 %v149, 127
    %v214 = vpop.permute.xlu0 %213
    %215 = vrot.lane.b32.xlu0 %v151, 127
    %v216 = vpop.permute.xlu0 %215
    %vm217 = vcmp.lt.s32.totalorder %v62, 127
    %v218 = vsel %vm217, %v210, %v214
    %v219 = vsel %vm217, %v212, %v216
    %v220 = vsel %vm217, %v214, %v210
    %v221 = vsel %vm217, %v216, %v212
    %v222 = vsel %vm64, 1, 0
    %v223 = vperm.slane %v222, 0
    %vm224 = vcmp.eq.s32.totalorder %v223, 1
    %v225 = vsel %vm224, %v218, 0.0
    %v226 = vsel %vm224, %v220, 0.0
    %v227 = vsel %vm224, %v219, 0.0
    %v228 = vsel %vm224, %v221, 0.0
    %v229 = vadd.f32 %v191, %v225
    %v230 = vadd.f32 %v205, %v226
    %v231 = vadd.f32 %v193, %v227
    %v232 = vadd.f32 %v207, %v228
    %234 = vset.pattern.permute.xlu0 0
    %235 = vperm.xlu0 %234, %v34
    %v236 = vpop.permute.xlu0 %235
    %239 = vset.pattern.permute.xlu0 0
    %240 = vperm.xlu0 %239, %v35
    %v241 = vpop.permute.xlu0 %240
    %v243 = vadd.f32 %v229, %v236
    %v244 = vadd.f32 %v230, %v236
    %v245 = vadd.f32 %v231, %v241
    %v246 = vadd.f32 %v232, %v241
    %v247 = vld [vmem:[%s2] sm:$0xff]
    %v248 = vld [vmem:[%s2 + $0x8] sm:$0xff]
    %249 = vadd.xlane.f32.xlu0 %v243
    %v250 = vpop.xlane.xlu0 %249
    %251 = vadd.xlane.f32.xlu0 %v245
    %v252 = vpop.xlane.xlu0 %251
    %v253 = vmul.f32 %v243, %v243
    %v254 = vmul.f32 %v245, %v245
    %255 = vadd.xlane.f32.xlu0 %v253
    %v256 = vpop.xlane.xlu0 %255
    %257 = vadd.xlane.f32.xlu0 %v254
    %v258 = vpop.xlane.xlu0 %257
    %vm259 = vcmp.eq.s32.totalorder %v62, 0
    %v260 = vsel %vm259, 1, 0
    %vm261 = vcmp.eq.s32.totalorder %v260, 1
    %v262 = vsel %vm261, %v250, %v256
    %v263 = vsel %vm261, %v252, %v258
    %vm264 = vcmask 130048
    %v266 = vsel %vm264, %v36, 0
    %268 = vmatpush.msra.mxu0 0.0
    %269 = vmatpush.msra.mxu0 0.0
    %270 = vmatpush.msra.mxu0 0.0
    %271 = vmatpush.msra.mxu0 0.0
    %272 = vmatpush.msra.mxu0 0.0
    %273 = vmatpush.msra.mxu0 0.0
    %274 = vmatpush.msra.mxu0 0.0
    %275 = vmatpush.msra.mxu0 0.0
    %276 = vmatpush.msra.mxu0 0.0
    %277 = vmatpush.msra.mxu0 0.0
    %278 = vmatpush.msra.mxu0 0.0
    %279 = vmatpush.msra.mxu0 0.0
    %280 = vmatpush.msra.mxu0 0.0
    %281 = vmatpush.msra.mxu0 0.0
    %282 = vmatpush.msra.mxu0 %v263
    %283 = vmatpush.msra.mxu0 %v262
    %284 = vmatmul.f32.gmra.mxu0 %v266
    %v285 = vpop.f32.mrf.mxu0
    %v286 = vadd.f32 0.0, %v285
    %287 = vdwg.mxu0
    %v289 = vsel %vm72, %v37, 0
    %v292 = vsel %vm72, %v38, 0
    %294 = vmatpush.msra.mxu0 0.0
    %295 = vmatpush.msra.mxu0 0.0
    %296 = vmatpush.msra.mxu0 0.0
    %297 = vmatpush.msra.mxu0 0.0
    %298 = vmatpush.msra.mxu0 0.0
    %299 = vmatpush.msra.mxu0 0.0
    %300 = vmatpush.msra.mxu0 0.0
    %301 = vmatpush.msra.mxu0 0.0
    %302 = vmatpush.msra.mxu0 0.0
    %303 = vmatpush.msra.mxu0 0.0
    %304 = vmatpush.msra.mxu0 0.0
    %305 = vmatpush.msra.mxu0 0.0
    %306 = vmatpush.msra.mxu0 0.0
    %307 = vmatpush.msra.mxu0 0.0
    %308 = vmatpush.msra.mxu0 0.0
    %309 = vmatpush.msra.mxu0 %v286
    %310 = vmatmul.f32.gmra.mxu0 %v289
    %v311 = vpop.f32.mrf.mxu0
    %v312 = vadd.f32 0.0, %v311
    %313 = vmatmul.f32.gmra.mxu0 %v292
    %v314 = vpop.f32.mrf.mxu0
    %v315 = vadd.f32 0.0, %v314
    %316 = vdwg.mxu0
    %v317 = vmul.f32 %v312, 0.00390625
    %v318 = vmul.f32 %v315, 0.00390625
    %v319 = vmul.f32 %v317, %v317
    %v320 = vmul.f32 %v318, %v318
    %323 = vrot.lane.b32.xlu0 %v319, 1
    %v324 = vpop.permute.xlu0 %323
    %325 = vrot.lane.b32.xlu0 %v320, 1
    %v326 = vpop.permute.xlu0 %325
    %v329 = vsub.f32 %v317, %v324
    %v330 = vsub.f32 %v318, %v326
    %v331 = vmax.f32 %v329, 0.0
    %v332 = vmax.f32 %v330, 0.0
    %v333 = vadd.f32 %v331, 1e-05
    %v334 = vadd.f32 %v332, 1e-05
    %v335 = vrsqrt.pop %v333
    %v336 = vmul.f32 %v335, %v333
    %v337 = vmul.f32 %v336, %v335
    %v338 = vmul.f32 0.5, %v337
    %v339 = vsub.f32 1.5, %v338
    %v340 = vmul.f32 %v335, %v339
    %vm341 = vweird.f32 %v333
    %vm342 = vweird.f32 %v335
    %vm343 = vmor %vm341, %vm342
    %v344 = vsel %vm343, %v335, %v340
    %v345 = vrsqrt.pop %v334
    %v346 = vmul.f32 %v345, %v334
    %v347 = vmul.f32 %v346, %v345
    %v348 = vmul.f32 0.5, %v347
    %v349 = vsub.f32 1.5, %v348
    %v350 = vmul.f32 %v345, %v349
    %vm351 = vweird.f32 %v334
    %vm352 = vweird.f32 %v345
    %vm353 = vmor %vm351, %vm352
    %v354 = vsel %vm353, %v345, %v350
    %v355 = vmul.f32 %v344, %v34
    %v356 = vmul.f32 %v354, %v35
    %359 = vrot.lane.b32.xlu0 %v355, 127
    %v360 = vpop.permute.xlu0 %359
    %361 = vrot.lane.b32.xlu0 %v356, 127
    %v362 = vpop.permute.xlu0 %361
    %v365 = vmul.f32 %v317, %v360
    %v366 = vmul.f32 %v318, %v362
    %369 = vrot.lane.b32.xlu0 %v365, 2
    %v370 = vpop.permute.xlu0 %369
    %371 = vrot.lane.b32.xlu0 %v366, 2
    %v372 = vpop.permute.xlu0 %371
    %v375 = vsub.f32 %v34, %v370
    %v376 = vsub.f32 %v35, %v372
    %v377 = vadd.f32 %v247, 1.0
    %v378 = vadd.f32 %v248, 1.0
    %381 = vrot.lane.b32.xlu0 %v377, 1
    %v382 = vpop.permute.xlu0 %381
    %383 = vrot.lane.b32.xlu0 %v378, 1
    %v384 = vpop.permute.xlu0 %383
    %v387 = vmul.f32 %v355, %v382
    %v388 = vmul.f32 %v356, %v384
    %389 = vrot.lane.b32.xlu0 %v377, 2
    %v390 = vpop.permute.xlu0 %389
    %391 = vrot.lane.b32.xlu0 %v378, 2
    %v392 = vpop.permute.xlu0 %391
    %v395 = vmul.f32 %v375, %v390
    %v396 = vmul.f32 %v376, %v392
    %399 = vrot.lane.b32.xlu0 %v247, 1
    %v400 = vpop.permute.xlu0 %399
    %401 = vrot.lane.b32.xlu0 %v248, 1
    %v402 = vpop.permute.xlu0 %401
    %v405 = vadd.f32 %v395, %v400
    %v406 = vadd.f32 %v396, %v402
    %408 = vset.pattern.permute.xlu0 1
    %409 = vperm.xlu0 %408, %v387
    %v410 = vpop.permute.xlu0 %409
    %413 = vset.pattern.permute.xlu0 1
    %414 = vperm.xlu0 %413, %v388
    %v415 = vpop.permute.xlu0 %414
    %v417 = vmul.f32 %v243, %v410
    %v418 = vmul.f32 %v245, %v415
    %420 = vset.pattern.permute.xlu0 2
    %421 = vperm.xlu0 %420, %v405
    %v422 = vpop.permute.xlu0 %421
    %425 = vset.pattern.permute.xlu0 2
    %426 = vperm.xlu0 %425, %v406
    %v427 = vpop.permute.xlu0 %426
    %v429 = vadd.f32 %v417, %v422
    %v430 = vadd.f32 %v418, %v427
    %v431 = vxor.u32 %v429, 2147483648
    %v432 = vxor.u32 %v430, 2147483648
    %v433 = vmul.f32 %v431, 1.442695
    %v434 = vpow.pop %v433
    %v435 = vmul.f32 %v432, 1.442695
    %v436 = vpow.pop %v435
    %v437 = vadd.f32 %v434, 1.0
    %v438 = vadd.f32 %v436, 1.0
    %v439 = vrcp.pop %v437
    %v440 = vmul.f32 %v437, %v439
    %v441 = vsub.f32 1.0, %v440
    %v442 = vmul.f32 %v439, %v441
    %v443 = vadd.f32 %v439, %v442
    %vm444 = vweird.f32 %v437
    %vm445 = vweird.f32 %v439
    %vm446 = vmor %vm444, %vm445
    %v447 = vsel %vm446, %v439, %v443
    %v448 = vand.u32 2147483647, %v437
    %vm449 = vcmp.eq.f32.partialorder %v448, 8.507059e+37
    %v450 = vand.u32 %v437, 2147483648
    %v451 = vor.u32 1.1754944e-38, %v450
    %v452 = vsel %vm449, %v451, %v447
    %v453 = vmul.f32 1.0, %v452
    %v454 = vrcp.pop %v438
    %v455 = vmul.f32 %v438, %v454
    %v456 = vsub.f32 1.0, %v455
    %v457 = vmul.f32 %v454, %v456
    %v458 = vadd.f32 %v454, %v457
    %vm459 = vweird.f32 %v438
    %vm460 = vweird.f32 %v454
    %vm461 = vmor %vm459, %vm460
    %v462 = vsel %vm461, %v454, %v458
    %v463 = vand.u32 2147483647, %v438
    %vm464 = vcmp.eq.f32.partialorder %v463, 8.507059e+37
    %v465 = vand.u32 %v438, 2147483648
    %v466 = vor.u32 1.1754944e-38, %v465
    %v467 = vsel %vm464, %v466, %v462
    %v468 = vmul.f32 1.0, %v467
    %v469 = vmul.f32 %v429, %v453
    %v470 = vmul.f32 %v430, %v468
    %v471 = vunpack.c.l.bf16 %v42
    %v472 = vperm.slane %v471, 0
    %v473 = vmul.f32 %v469, %v472
    %v474 = vmul.f32 %v470, %v472
    %v475 = vpack.c.bf16 %v473, %v473
    %v476 = vpack.c.bf16 %v474, %v474
    %s477 = scalar_lea.vmem %s2, 16
    %v478 = vld [vmem:[%s477] sm:$0xff]
    %v479 = vld [vmem:[%s477 + $0x8] sm:$0xff]
    %480 = vadd.xlane.f32.xlu0 %v244
    %v481 = vpop.xlane.xlu0 %480
    %482 = vadd.xlane.f32.xlu0 %v246
    %v483 = vpop.xlane.xlu0 %482
    %v484 = vmul.f32 %v244, %v244
    %v485 = vmul.f32 %v246, %v246
    %486 = vadd.xlane.f32.xlu0 %v484
    %v487 = vpop.xlane.xlu0 %486
    %488 = vadd.xlane.f32.xlu0 %v485
    %v489 = vpop.xlane.xlu0 %488
    %v490 = vsel %vm261, %v481, %v487
    %v491 = vsel %vm261, %v483, %v489
    %492 = vmatpush.msra.mxu0 0.0
    %493 = vmatpush.msra.mxu0 0.0
    %494 = vmatpush.msra.mxu0 0.0
    %495 = vmatpush.msra.mxu0 0.0
    %496 = vmatpush.msra.mxu0 0.0
    %497 = vmatpush.msra.mxu0 0.0
    %498 = vmatpush.msra.mxu0 0.0
    %499 = vmatpush.msra.mxu0 0.0
    %500 = vmatpush.msra.mxu0 0.0
    %501 = vmatpush.msra.mxu0 0.0
    %502 = vmatpush.msra.mxu0 0.0
    %503 = vmatpush.msra.mxu0 0.0
    %504 = vmatpush.msra.mxu0 0.0
    %505 = vmatpush.msra.mxu0 0.0
    %506 = vmatpush.msra.mxu0 %v491
    %507 = vmatpush.msra.mxu0 %v490
    %508 = vmatmul.f32.gmra.mxu0 %v266
    %v509 = vpop.f32.mrf.mxu0
    %v510 = vadd.f32 0.0, %v509
    %511 = vdwg.mxu0
    %512 = vmatpush.msra.mxu0 0.0
    %513 = vmatpush.msra.mxu0 0.0
    %514 = vmatpush.msra.mxu0 0.0
    %515 = vmatpush.msra.mxu0 0.0
    %516 = vmatpush.msra.mxu0 0.0
    %517 = vmatpush.msra.mxu0 0.0
    %518 = vmatpush.msra.mxu0 0.0
    %519 = vmatpush.msra.mxu0 0.0
    %520 = vmatpush.msra.mxu0 0.0
    %521 = vmatpush.msra.mxu0 0.0
    %522 = vmatpush.msra.mxu0 0.0
    %523 = vmatpush.msra.mxu0 0.0
    %524 = vmatpush.msra.mxu0 0.0
    %525 = vmatpush.msra.mxu0 0.0
    %526 = vmatpush.msra.mxu0 0.0
    %527 = vmatpush.msra.mxu0 %v510
    %528 = vmatmul.f32.gmra.mxu0 %v289
    %v529 = vpop.f32.mrf.mxu0
    %v530 = vadd.f32 0.0, %v529
    %531 = vmatmul.f32.gmra.mxu0 %v292
    %v532 = vpop.f32.mrf.mxu0
    %v533 = vadd.f32 0.0, %v532
    %534 = vdwg.mxu0
    %v535 = vmul.f32 %v530, 0.00390625
    %v536 = vmul.f32 %v533, 0.00390625
    %v537 = vmul.f32 %v535, %v535
    %v538 = vmul.f32 %v536, %v536
    %541 = vrot.lane.b32.xlu0 %v537, 1
    %v542 = vpop.permute.xlu0 %541
    %543 = vrot.lane.b32.xlu0 %v538, 1
    %v544 = vpop.permute.xlu0 %543
    %v547 = vsub.f32 %v535, %v542
    %v548 = vsub.f32 %v536, %v544
    %v549 = vmax.f32 %v547, 0.0
    %v550 = vmax.f32 %v548, 0.0
    %v551 = vadd.f32 %v549, 1e-05
    %v552 = vadd.f32 %v550, 1e-05
    %v553 = vrsqrt.pop %v551
    %v554 = vmul.f32 %v553, %v551
    %v555 = vmul.f32 %v554, %v553
    %v556 = vmul.f32 0.5, %v555
    %v557 = vsub.f32 1.5, %v556
    %v558 = vmul.f32 %v553, %v557
    %vm559 = vweird.f32 %v551
    %vm560 = vweird.f32 %v553
    %vm561 = vmor %vm559, %vm560
    %v562 = vsel %vm561, %v553, %v558
    %v563 = vrsqrt.pop %v552
    %v564 = vmul.f32 %v563, %v552
    %v565 = vmul.f32 %v564, %v563
    %v566 = vmul.f32 0.5, %v565
    %v567 = vsub.f32 1.5, %v566
    %v568 = vmul.f32 %v563, %v567
    %vm569 = vweird.f32 %v552
    %vm570 = vweird.f32 %v563
    %vm571 = vmor %vm569, %vm570
    %v572 = vsel %vm571, %v563, %v568
    %v573 = vmul.f32 %v562, %v34
    %v574 = vmul.f32 %v572, %v35
    %577 = vrot.lane.b32.xlu0 %v573, 127
    %v578 = vpop.permute.xlu0 %577
    %579 = vrot.lane.b32.xlu0 %v574, 127
    %v580 = vpop.permute.xlu0 %579
    %v583 = vmul.f32 %v535, %v578
    %v584 = vmul.f32 %v536, %v580
    %587 = vrot.lane.b32.xlu0 %v583, 2
    %v588 = vpop.permute.xlu0 %587
    %589 = vrot.lane.b32.xlu0 %v584, 2
    %v590 = vpop.permute.xlu0 %589
    %v593 = vsub.f32 %v34, %v588
    %v594 = vsub.f32 %v35, %v590
    %v595 = vadd.f32 %v478, 1.0
    %v596 = vadd.f32 %v479, 1.0
    %599 = vrot.lane.b32.xlu0 %v595, 1
    %v600 = vpop.permute.xlu0 %599
    %601 = vrot.lane.b32.xlu0 %v596, 1
    %v602 = vpop.permute.xlu0 %601
    %v605 = vmul.f32 %v573, %v600
    %v606 = vmul.f32 %v574, %v602
    %607 = vrot.lane.b32.xlu0 %v595, 2
    %v608 = vpop.permute.xlu0 %607
    %609 = vrot.lane.b32.xlu0 %v596, 2
    %v610 = vpop.permute.xlu0 %609
    %v613 = vmul.f32 %v593, %v608
    %v614 = vmul.f32 %v594, %v610
    %617 = vrot.lane.b32.xlu0 %v478, 1
    %v618 = vpop.permute.xlu0 %617
    %619 = vrot.lane.b32.xlu0 %v479, 1
    %v620 = vpop.permute.xlu0 %619
    %v623 = vadd.f32 %v613, %v618
    %v624 = vadd.f32 %v614, %v620
    %626 = vset.pattern.permute.xlu0 1
    %627 = vperm.xlu0 %626, %v605
    %v628 = vpop.permute.xlu0 %627
    %631 = vset.pattern.permute.xlu0 1
    %632 = vperm.xlu0 %631, %v606
    %v633 = vpop.permute.xlu0 %632
    %v635 = vmul.f32 %v244, %v628
    %v636 = vmul.f32 %v246, %v633
    %638 = vset.pattern.permute.xlu0 2
    %639 = vperm.xlu0 %638, %v623
    %v640 = vpop.permute.xlu0 %639
    %643 = vset.pattern.permute.xlu0 2
    %644 = vperm.xlu0 %643, %v624
    %v645 = vpop.permute.xlu0 %644
    %v647 = vadd.f32 %v635, %v640
    %v648 = vadd.f32 %v636, %v645
    %v649 = vxor.u32 %v647, 2147483648
    %v650 = vxor.u32 %v648, 2147483648
    %v651 = vmul.f32 %v649, 1.442695
    %v652 = vpow.pop %v651
    %v653 = vmul.f32 %v650, 1.442695
    %v654 = vpow.pop %v653
    %v655 = vadd.f32 %v652, 1.0
    %v656 = vadd.f32 %v654, 1.0
    %v657 = vrcp.pop %v655
    %v658 = vmul.f32 %v655, %v657
    %v659 = vsub.f32 1.0, %v658
    %v660 = vmul.f32 %v657, %v659
    %v661 = vadd.f32 %v657, %v660
    %vm662 = vweird.f32 %v655
    %vm663 = vweird.f32 %v657
    %vm664 = vmor %vm662, %vm663
    %v665 = vsel %vm664, %v657, %v661
    %v666 = vand.u32 2147483647, %v655
    %vm667 = vcmp.eq.f32.partialorder %v666, 8.507059e+37
    %v668 = vand.u32 %v655, 2147483648
    %v669 = vor.u32 1.1754944e-38, %v668
    %v670 = vsel %vm667, %v669, %v665
    %v671 = vmul.f32 1.0, %v670
    %v672 = vrcp.pop %v656
    %v673 = vmul.f32 %v656, %v672
    %v674 = vsub.f32 1.0, %v673
    %v675 = vmul.f32 %v672, %v674
    %v676 = vadd.f32 %v672, %v675
    %vm677 = vweird.f32 %v656
    %vm678 = vweird.f32 %v672
    %vm679 = vmor %vm677, %vm678
    %v680 = vsel %vm679, %v672, %v676
    %v681 = vand.u32 2147483647, %v656
    %vm682 = vcmp.eq.f32.partialorder %v681, 8.507059e+37
    %v683 = vand.u32 %v656, 2147483648
    %v684 = vor.u32 1.1754944e-38, %v683
    %v685 = vsel %vm682, %v684, %v680
    %v686 = vmul.f32 1.0, %v685
    %v687 = vmul.f32 %v647, %v671
    %v688 = vmul.f32 %v648, %v686
    %v689 = vunpack.c.l.bf16 %v44
    %v690 = vperm.slane %v689, 0
    %v691 = vmul.f32 %v687, %v690
    %v692 = vmul.f32 %v688, %v690
    %v693 = vpack.c.bf16 %v691, %v691
    %v694 = vpack.c.bf16 %v692, %v692
    %v697 = vunpack.c.l.b16 %v475
    %v698 = vunpack.c.l.b16 %v476
    %v699 = vpack.c.b16 %v698, %v697
    %v703 = vunpack.c.l.b16 %v693
    %v704 = vunpack.c.l.b16 %v694
    %v705 = vpack.c.b16 %v704, %v703
    %v707 = vld [vmem:[%s4] sm:$0xf]
    %v708 = vld [vmem:[%s4 + $0x4] sm:$0xf]
    %v711 = vunpack.c.l.b16 %v707
    %v712 = vunpack.c.l.b16 %v708
    %v713 = vpack.c.b16 %v712, %v711
    %v715 = vsel %vm264, %v713, 0
    %717 = vmatpush.bf16.msra.mxu0 0
    %718 = vmatpush.bf16.msra.mxu0 0
    %719 = vmatpush.bf16.msra.mxu0 0
    %720 = vmatpush.bf16.msra.mxu0 0
    %721 = vmatpush.bf16.msra.mxu0 0
    %722 = vmatpush.bf16.msra.mxu0 0
    %723 = vmatpush.bf16.msra.mxu0 0
    %724 = vmatpush.bf16.msra.mxu0 %v699
    %725 = vmatmul.bf16.gmra.mxu0 %v715
    %v726 = vpop.f32.mrf.mxu0
    %v727 = vadd.f32 0.0, %v726
    %v728 = vpop.f32.mrf.mxu0
    %v729 = vadd.f32 0.0, %v728
    %730 = vdwg.mxu0
    %731 = vmatpush.bf16.msra.mxu0 0
    %732 = vmatpush.bf16.msra.mxu0 0
    %733 = vmatpush.bf16.msra.mxu0 0
    %734 = vmatpush.bf16.msra.mxu0 0
    %735 = vmatpush.bf16.msra.mxu0 0
    %736 = vmatpush.bf16.msra.mxu0 0
    %737 = vmatpush.bf16.msra.mxu0 0
    %738 = vmatpush.bf16.msra.mxu0 %v705
    %739 = vmatmul.bf16.gmra.mxu0 %v715
    %v740 = vpop.f32.mrf.mxu0
    %v741 = vadd.f32 0.0, %v740
    %v742 = vpop.f32.mrf.mxu0
    %v743 = vadd.f32 0.0, %v742
    %744 = vdwg.mxu0
    %s745 = scalar_lea.vmem %s4, 8
    %v746 = vld [vmem:[%s745] sm:$0xf]
    %v747 = vld [vmem:[%s745 + $0x4] sm:$0xf]
    %s748 = scalar_lea.vmem %s4, 16
    %v749 = vld [vmem:[%s748] sm:$0xf]
    %v750 = vld [vmem:[%s748 + $0x4] sm:$0xf]
    %v753 = vunpack.c.l.b16 %v749
    %v754 = vunpack.c.l.b16 %v750
    %v755 = vpack.c.b16 %v754, %v753
    %v757 = vsel %vm264, %v755, 0
    %759 = vmatpush.bf16.msra.mxu0 0
    %760 = vmatpush.bf16.msra.mxu0 0
    %761 = vmatpush.bf16.msra.mxu0 0
    %762 = vmatpush.bf16.msra.mxu0 0
    %763 = vmatpush.bf16.msra.mxu0 0
    %764 = vmatpush.bf16.msra.mxu0 0
    %765 = vmatpush.bf16.msra.mxu0 0
    %766 = vmatpush.bf16.msra.mxu0 %v699
    %767 = vmatmul.bf16.gmra.mxu0 %v757
    %v768 = vpop.f32.mrf.mxu0
    %v769 = vadd.f32 0.0, %v768
    %v770 = vpop.f32.mrf.mxu0
    %v771 = vadd.f32 0.0, %v770
    %772 = vdwg.mxu0
    %773 = vmatpush.bf16.msra.mxu0 0
    %774 = vmatpush.bf16.msra.mxu0 0
    %775 = vmatpush.bf16.msra.mxu0 0
    %776 = vmatpush.bf16.msra.mxu0 0
    %777 = vmatpush.bf16.msra.mxu0 0
    %778 = vmatpush.bf16.msra.mxu0 0
    %779 = vmatpush.bf16.msra.mxu0 0
    %780 = vmatpush.bf16.msra.mxu0 %v705
    %781 = vmatmul.bf16.gmra.mxu0 %v757
    %v782 = vpop.f32.mrf.mxu0
    %v783 = vadd.f32 0.0, %v782
    %v784 = vpop.f32.mrf.mxu0
    %v785 = vadd.f32 0.0, %v784
    %786 = vdwg.mxu0
    %787 = vrot.lane.b32.xlu0 %v727, 1
    %v788 = vpop.permute.xlu0 %787
    %789 = vrot.lane.b32.xlu0 %v729, 1
    %v790 = vpop.permute.xlu0 %789
    %791 = vrot.lane.b32.xlu0 %v741, 1
    %v792 = vpop.permute.xlu0 %791
    %793 = vrot.lane.b32.xlu0 %v743, 1
    %v794 = vpop.permute.xlu0 %793
    %v795 = vsel %vm161, %v788, %v792
    %v796 = vsel %vm161, %v790, %v794
    %v797 = vsel %vm161, %v792, %v788
    %v798 = vsel %vm161, %v794, %v790
    %v799 = vsel %vm168, %v797, 0.0
    %v800 = vsel %vm168, %v795, 0.0
    %v801 = vsel %vm168, %v798, 0.0
    %v802 = vsel %vm168, %v796, 0.0
    %v805 = vunpack.c.l.b16 %v746
    %v806 = vunpack.c.l.b16 %v747
    %v807 = vpack.c.b16 %v806, %v805
    %v809 = vsel %vm264, %v807, 0
    %811 = vmatpush.bf16.msra.mxu0 0
    %812 = vmatpush.bf16.msra.mxu0 0
    %813 = vmatpush.bf16.msra.mxu0 0
    %814 = vmatpush.bf16.msra.mxu0 0
    %815 = vmatpush.bf16.msra.mxu0 0
    %816 = vmatpush.bf16.msra.mxu0 0
    %817 = vmatpush.bf16.msra.mxu0 0
    %818 = vmatpush.bf16.msra.mxu0 %v699
    %819 = vmatmul.bf16.gmra.mxu0 %v809
    %v820 = vpop.f32.mrf.mxu0
    %v821 = vadd.f32 %v799, %v820
    %v822 = vpop.f32.mrf.mxu0
    %v823 = vadd.f32 %v801, %v822
    %824 = vdwg.mxu0
    %825 = vmatpush.bf16.msra.mxu0 0
    %826 = vmatpush.bf16.msra.mxu0 0
    %827 = vmatpush.bf16.msra.mxu0 0
    %828 = vmatpush.bf16.msra.mxu0 0
    %829 = vmatpush.bf16.msra.mxu0 0
    %830 = vmatpush.bf16.msra.mxu0 0
    %831 = vmatpush.bf16.msra.mxu0 0
    %832 = vmatpush.bf16.msra.mxu0 %v705
    %833 = vmatmul.bf16.gmra.mxu0 %v809
    %v834 = vpop.f32.mrf.mxu0
    %v835 = vadd.f32 %v800, %v834
    %v836 = vpop.f32.mrf.mxu0
    %v837 = vadd.f32 %v802, %v836
    %838 = vdwg.mxu0
    %839 = vrot.lane.b32.xlu0 %v769, 127
    %v840 = vpop.permute.xlu0 %839
    %841 = vrot.lane.b32.xlu0 %v771, 127
    %v842 = vpop.permute.xlu0 %841
    %843 = vrot.lane.b32.xlu0 %v783, 127
    %v844 = vpop.permute.xlu0 %843
    %845 = vrot.lane.b32.xlu0 %v785, 127
    %v846 = vpop.permute.xlu0 %845
    %v847 = vsel %vm217, %v840, %v844
    %v848 = vsel %vm217, %v842, %v846
    %v849 = vsel %vm217, %v844, %v840
    %v850 = vsel %vm217, %v846, %v842
    %v851 = vsel %vm224, %v847, 0.0
    %v852 = vsel %vm224, %v849, 0.0
    %v853 = vsel %vm224, %v848, 0.0
    %v854 = vsel %vm224, %v850, 0.0
    %v855 = vadd.f32 %v821, %v851
    %v856 = vadd.f32 %v835, %v852
    %v857 = vadd.f32 %v823, %v853
    %v858 = vadd.f32 %v837, %v854
    %859 = vset.pattern.permute.xlu0 3
    %860 = vperm.xlu0 %859, %v34
    %v861 = vpop.permute.xlu0 %860
    %863 = vset.pattern.permute.xlu0 3
    %864 = vperm.xlu0 %863, %v35
    %v865 = vpop.permute.xlu0 %864
    %v867 = vadd.f32 %v855, %v861
    %v868 = vadd.f32 %v856, %v861
    %v869 = vadd.f32 %v857, %v865
    %v870 = vadd.f32 %v858, %v865
    %v871 = vld [vmem:[%s5] sm:$0xf]
    %v872 = vld [vmem:[%s5 + $0x4] sm:$0xf]
    %873 = vset.pattern.permute.xlu0 6
    %874 = vperm.xlu0 %873, %v34
    %v875 = vpop.permute.xlu0 %874
    %877 = vset.pattern.permute.xlu0 6
    %878 = vperm.xlu0 %877, %v35
    %v879 = vpop.permute.xlu0 %878
    %v883 = vunpack.c.l.b16 %v871
    %v884 = vunpack.c.l.b16 %v872
    %v885 = vpack.c.b16 %v884, %v883
    %v887 = vsel %vm72, %v885, 0
    %v890 = vsel %vm76, %v39, 0
    %v893 = vsel %vm76, %v41, 0
    %895 = vmatpush.bf16.msra.mxu0 0
    %896 = vmatpush.bf16.msra.mxu0 0
    %897 = vmatpush.bf16.msra.mxu0 0
    %898 = vmatpush.bf16.msra.mxu0 0
    %899 = vmatpush.bf16.msra.mxu0 0
    %900 = vmatpush.bf16.msra.mxu0 0
    %901 = vmatpush.bf16.msra.mxu0 0
    %902 = vmatpush.bf16.msra.mxu0 %v890
    %903 = vmatmul.bf16.gmra.mxu0 %v887
    %v904 = vpop.f32.mrf.mxu0
    %v905 = vadd.f32 %v875, %v904
    %v906 = vpop.f32.mrf.mxu0
    %v907 = vadd.f32 %v879, %v906
    %908 = vdwg.mxu0
    %909 = vmatpush.bf16.msra.mxu0 0
    %910 = vmatpush.bf16.msra.mxu0 0
    %911 = vmatpush.bf16.msra.mxu0 0
    %912 = vmatpush.bf16.msra.mxu0 0
    %913 = vmatpush.bf16.msra.mxu0 0
    %914 = vmatpush.bf16.msra.mxu0 0
    %915 = vmatpush.bf16.msra.mxu0 0
    %916 = vmatpush.bf16.msra.mxu0 %v893
    %917 = vmatmul.bf16.gmra.mxu0 %v887
    %v918 = vpop.f32.mrf.mxu0
    %v919 = vadd.f32 %v875, %v918
    %v920 = vpop.f32.mrf.mxu0
    %v921 = vadd.f32 %v879, %v920
    %922 = vdwg.mxu0
    %923 = vadd.xlane.f32.xlu0 %v867
    %v924 = vpop.xlane.xlu0 %923
    %925 = vadd.xlane.f32.xlu0 %v869
    %v926 = vpop.xlane.xlu0 %925
    %v927 = vmul.f32 %v867, %v867
    %v928 = vmul.f32 %v869, %v869
    %929 = vadd.xlane.f32.xlu0 %v927
    %v930 = vpop.xlane.xlu0 %929
    %931 = vadd.xlane.f32.xlu0 %v928
    %v932 = vpop.xlane.xlu0 %931
    %v933 = vsel %vm261, %v924, %v930
    %v934 = vsel %vm261, %v926, %v932
    %935 = vmatpush.msra.mxu0 0.0
    %936 = vmatpush.msra.mxu0 0.0
    %937 = vmatpush.msra.mxu0 0.0
    %938 = vmatpush.msra.mxu0 0.0
    %939 = vmatpush.msra.mxu0 0.0
    %940 = vmatpush.msra.mxu0 0.0
    %941 = vmatpush.msra.mxu0 0.0
    %942 = vmatpush.msra.mxu0 0.0
    %943 = vmatpush.msra.mxu0 0.0
    %944 = vmatpush.msra.mxu0 0.0
    %945 = vmatpush.msra.mxu0 0.0
    %946 = vmatpush.msra.mxu0 0.0
    %947 = vmatpush.msra.mxu0 0.0
    %948 = vmatpush.msra.mxu0 0.0
    %949 = vmatpush.msra.mxu0 %v934
    %950 = vmatpush.msra.mxu0 %v933
    %951 = vmatmul.f32.gmra.mxu0 %v266
    %v952 = vpop.f32.mrf.mxu0
    %v953 = vadd.f32 0.0, %v952
    %954 = vdwg.mxu0
    %955 = vmatpush.msra.mxu0 0.0
    %956 = vmatpush.msra.mxu0 0.0
    %957 = vmatpush.msra.mxu0 0.0
    %958 = vmatpush.msra.mxu0 0.0
    %959 = vmatpush.msra.mxu0 0.0
    %960 = vmatpush.msra.mxu0 0.0
    %961 = vmatpush.msra.mxu0 0.0
    %962 = vmatpush.msra.mxu0 0.0
    %963 = vmatpush.msra.mxu0 0.0
    %964 = vmatpush.msra.mxu0 0.0
    %965 = vmatpush.msra.mxu0 0.0
    %966 = vmatpush.msra.mxu0 0.0
    %967 = vmatpush.msra.mxu0 0.0
    %968 = vmatpush.msra.mxu0 0.0
    %969 = vmatpush.msra.mxu0 0.0
    %970 = vmatpush.msra.mxu0 %v953
    %971 = vmatmul.f32.gmra.mxu0 %v289
    %v972 = vpop.f32.mrf.mxu0
    %v973 = vadd.f32 0.0, %v972
    %974 = vmatmul.f32.gmra.mxu0 %v292
    %v975 = vpop.f32.mrf.mxu0
    %v976 = vadd.f32 0.0, %v975
    %977 = vdwg.mxu0
    %v978 = vmul.f32 %v973, 0.00390625
    %v979 = vmul.f32 %v976, 0.00390625
    %v980 = vmul.f32 %v978, %v978
    %v981 = vmul.f32 %v979, %v979
    %984 = vrot.lane.b32.xlu0 %v980, 1
    %v985 = vpop.permute.xlu0 %984
    %986 = vrot.lane.b32.xlu0 %v981, 1
    %v987 = vpop.permute.xlu0 %986
    %v990 = vsub.f32 %v978, %v985
    %v991 = vsub.f32 %v979, %v987
    %v992 = vmax.f32 %v990, 0.0
    %v993 = vmax.f32 %v991, 0.0
    %v994 = vadd.f32 %v992, 1e-05
    %v995 = vadd.f32 %v993, 1e-05
    %v996 = vrsqrt.pop %v994
    %v997 = vmul.f32 %v996, %v994
    %v998 = vmul.f32 %v997, %v996
    %v999 = vmul.f32 0.5, %v998
    %v1000 = vsub.f32 1.5, %v999
    %v1001 = vmul.f32 %v996, %v1000
    %vm1002 = vweird.f32 %v994
    %vm1003 = vweird.f32 %v996
    %vm1004 = vmor %vm1002, %vm1003
    %v1005 = vsel %vm1004, %v996, %v1001
    %v1006 = vrsqrt.pop %v995
    %v1007 = vmul.f32 %v1006, %v995
    %v1008 = vmul.f32 %v1007, %v1006
    %v1009 = vmul.f32 0.5, %v1008
    %v1010 = vsub.f32 1.5, %v1009
    %v1011 = vmul.f32 %v1006, %v1010
    %vm1012 = vweird.f32 %v995
    %vm1013 = vweird.f32 %v1006
    %vm1014 = vmor %vm1012, %vm1013
    %v1015 = vsel %vm1014, %v1006, %v1011
    %1016 = vrot.lane.b32.xlu0 %v34, 125
    %v1017 = vpop.permute.xlu0 %1016
    %1018 = vrot.lane.b32.xlu0 %v35, 125
    %v1019 = vpop.permute.xlu0 %1018
    %v1022 = vmul.f32 %v1005, %v1017
    %v1023 = vmul.f32 %v1015, %v1019
    %1026 = vrot.lane.b32.xlu0 %v1022, 127
    %v1027 = vpop.permute.xlu0 %1026
    %1028 = vrot.lane.b32.xlu0 %v1023, 127
    %v1029 = vpop.permute.xlu0 %1028
    %v1032 = vmul.f32 %v978, %v1027
    %v1033 = vmul.f32 %v979, %v1029
    %1036 = vrot.lane.b32.xlu0 %v1032, 5
    %v1037 = vpop.permute.xlu0 %1036
    %1038 = vrot.lane.b32.xlu0 %v1033, 5
    %v1039 = vpop.permute.xlu0 %1038
    %v1042 = vsub.f32 %v34, %v1037
    %v1043 = vsub.f32 %v35, %v1039
    %1044 = vset.pattern.permute.xlu0 1
    %1045 = vperm.xlu0 %1044, %v1022
    %v1046 = vpop.permute.xlu0 %1045
    %1048 = vset.pattern.permute.xlu0 1
    %1049 = vperm.xlu0 %1048, %v1023
    %v1050 = vpop.permute.xlu0 %1049
    %v1052 = vmul.f32 %v867, %v1046
    %v1053 = vmul.f32 %v869, %v1050
    %1055 = vset.pattern.permute.xlu0 5
    %1056 = vperm.xlu0 %1055, %v1042
    %v1057 = vpop.permute.xlu0 %1056
    %1060 = vset.pattern.permute.xlu0 5
    %1061 = vperm.xlu0 %1060, %v1043
    %v1062 = vpop.permute.xlu0 %1061
    %v1064 = vadd.f32 %v1052, %v1057
    %v1065 = vadd.f32 %v1053, %v1062
    %v1066 = vxor.u32 %v1064, 2147483648
    %v1067 = vxor.u32 %v1065, 2147483648
    %v1068 = vmul.f32 %v1066, 1.442695
    %v1069 = vpow.pop %v1068
    %v1070 = vmul.f32 %v1067, 1.442695
    %v1071 = vpow.pop %v1070
    %v1072 = vadd.f32 %v1069, 1.0
    %v1073 = vadd.f32 %v1071, 1.0
    %v1074 = vrcp.pop %v1072
    %v1075 = vmul.f32 %v1072, %v1074
    %v1076 = vsub.f32 1.0, %v1075
    %v1077 = vmul.f32 %v1074, %v1076
    %v1078 = vadd.f32 %v1074, %v1077
    %vm1079 = vweird.f32 %v1072
    %vm1080 = vweird.f32 %v1074
    %vm1081 = vmor %vm1079, %vm1080
    %v1082 = vsel %vm1081, %v1074, %v1078
    %v1083 = vand.u32 2147483647, %v1072
    %vm1084 = vcmp.eq.f32.partialorder %v1083, 8.507059e+37
    %v1085 = vand.u32 %v1072, 2147483648
    %v1086 = vor.u32 1.1754944e-38, %v1085
    %v1087 = vsel %vm1084, %v1086, %v1082
    %v1088 = vmul.f32 1.0, %v1087
    %v1089 = vrcp.pop %v1073
    %v1090 = vmul.f32 %v1073, %v1089
    %v1091 = vsub.f32 1.0, %v1090
    %v1092 = vmul.f32 %v1089, %v1091
    %v1093 = vadd.f32 %v1089, %v1092
    %vm1094 = vweird.f32 %v1073
    %vm1095 = vweird.f32 %v1089
    %vm1096 = vmor %vm1094, %vm1095
    %v1097 = vsel %vm1096, %v1089, %v1093
    %v1098 = vand.u32 2147483647, %v1073
    %vm1099 = vcmp.eq.f32.partialorder %v1098, 8.507059e+37
    %v1100 = vand.u32 %v1073, 2147483648
    %v1101 = vor.u32 1.1754944e-38, %v1100
    %v1102 = vsel %vm1099, %v1101, %v1097
    %v1103 = vmul.f32 1.0, %v1102
    %v1104 = vmul.f32 %v1064, %v1088
    %v1105 = vmul.f32 %v1065, %v1103
    %v1106 = vmul.f32 %v1104, %v472
    %v1107 = vmul.f32 %v1105, %v472
    %v1108 = vadd.f32 %v1106, %v905
    %v1109 = vadd.f32 %v1107, %v907
    %v1110 = vpack.c.bf16 %v1108, %v1108
    %v1111 = vpack.c.bf16 %v1109, %v1109
    %1112 = vst [vmem:[#allocation2] sm:$0xf] %v1110
    %1113 = vst [vmem:[#allocation2 + $0x4] sm:$0xf] %v1111
    %v1114 = vld [vmem:[%s43] sm:$0x1]
    %1115 = vadd.xlane.f32.xlu0 %v868
    %v1116 = vpop.xlane.xlu0 %1115
    %1117 = vadd.xlane.f32.xlu0 %v870
    %v1118 = vpop.xlane.xlu0 %1117
    %v1119 = vmul.f32 %v868, %v868
    %v1120 = vmul.f32 %v870, %v870
    %1121 = vadd.xlane.f32.xlu0 %v1119
    %v1122 = vpop.xlane.xlu0 %1121
    %1123 = vadd.xlane.f32.xlu0 %v1120
    %v1124 = vpop.xlane.xlu0 %1123
    %v1125 = vsel %vm261, %v1116, %v1122
    %v1126 = vsel %vm261, %v1118, %v1124
    %1127 = vmatpush.msra.mxu0 0.0
    %1128 = vmatpush.msra.mxu0 0.0
    %1129 = vmatpush.msra.mxu0 0.0
    %1130 = vmatpush.msra.mxu0 0.0
    %1131 = vmatpush.msra.mxu0 0.0
    %1132 = vmatpush.msra.mxu0 0.0
    %1133 = vmatpush.msra.mxu0 0.0
    %1134 = vmatpush.msra.mxu0 0.0
    %1135 = vmatpush.msra.mxu0 0.0
    %1136 = vmatpush.msra.mxu0 0.0
    %1137 = vmatpush.msra.mxu0 0.0
    %1138 = vmatpush.msra.mxu0 0.0
    %1139 = vmatpush.msra.mxu0 0.0
    %1140 = vmatpush.msra.mxu0 0.0
    %1141 = vmatpush.msra.mxu0 %v1126
    %1142 = vmatpush.msra.mxu0 %v1125
    %1143 = vmatmul.f32.gmra.mxu0 %v266
    %v1144 = vpop.f32.mrf.mxu0
    %v1145 = vadd.f32 0.0, %v1144
    %1146 = vdwg.mxu0
    %1147 = vmatpush.msra.mxu0 0.0
    %1148 = vmatpush.msra.mxu0 0.0
    %1149 = vmatpush.msra.mxu0 0.0
    %1150 = vmatpush.msra.mxu0 0.0
    %1151 = vmatpush.msra.mxu0 0.0
    %1152 = vmatpush.msra.mxu0 0.0
    %1153 = vmatpush.msra.mxu0 0.0
    %1154 = vmatpush.msra.mxu0 0.0
    %1155 = vmatpush.msra.mxu0 0.0
    %1156 = vmatpush.msra.mxu0 0.0
    %1157 = vmatpush.msra.mxu0 0.0
    %1158 = vmatpush.msra.mxu0 0.0
    %1159 = vmatpush.msra.mxu0 0.0
    %1160 = vmatpush.msra.mxu0 0.0
    %1161 = vmatpush.msra.mxu0 0.0
    %1162 = vmatpush.msra.mxu0 %v1145
    %1163 = vmatmul.f32.gmra.mxu0 %v289
    %v1164 = vpop.f32.mrf.mxu0
    %v1165 = vadd.f32 0.0, %v1164
    %1166 = vmatmul.f32.gmra.mxu0 %v292
    %v1167 = vpop.f32.mrf.mxu0
    %v1168 = vadd.f32 0.0, %v1167
    %1169 = vdwg.mxu0
    %v1170 = vmul.f32 %v1165, 0.00390625
    %v1171 = vmul.f32 %v1168, 0.00390625
    %v1172 = vmul.f32 %v1170, %v1170
    %v1173 = vmul.f32 %v1171, %v1171
    %1176 = vrot.lane.b32.xlu0 %v1172, 1
    %v1177 = vpop.permute.xlu0 %1176
    %1178 = vrot.lane.b32.xlu0 %v1173, 1
    %v1179 = vpop.permute.xlu0 %1178
    %v1182 = vsub.f32 %v1170, %v1177
    %v1183 = vsub.f32 %v1171, %v1179
    %v1184 = vmax.f32 %v1182, 0.0
    %v1185 = vmax.f32 %v1183, 0.0
    %v1186 = vadd.f32 %v1184, 1e-05
    %v1187 = vadd.f32 %v1185, 1e-05
    %v1188 = vrsqrt.pop %v1186
    %v1189 = vmul.f32 %v1188, %v1186
    %v1190 = vmul.f32 %v1189, %v1188
    %v1191 = vmul.f32 0.5, %v1190
    %v1192 = vsub.f32 1.5, %v1191
    %v1193 = vmul.f32 %v1188, %v1192
    %vm1194 = vweird.f32 %v1186
    %vm1195 = vweird.f32 %v1188
    %vm1196 = vmor %vm1194, %vm1195
    %v1197 = vsel %vm1196, %v1188, %v1193
    %v1198 = vrsqrt.pop %v1187
    %v1199 = vmul.f32 %v1198, %v1187
    %v1200 = vmul.f32 %v1199, %v1198
    %v1201 = vmul.f32 0.5, %v1200
    %v1202 = vsub.f32 1.5, %v1201
    %v1203 = vmul.f32 %v1198, %v1202
    %vm1204 = vweird.f32 %v1187
    %vm1205 = vweird.f32 %v1198
    %vm1206 = vmor %vm1204, %vm1205
    %v1207 = vsel %vm1206, %v1198, %v1203
    %v1208 = vmul.f32 %v1197, %v1017
    %v1209 = vmul.f32 %v1207, %v1019
    %1212 = vrot.lane.b32.xlu0 %v1208, 127
    %v1213 = vpop.permute.xlu0 %1212
    %1214 = vrot.lane.b32.xlu0 %v1209, 127
    %v1215 = vpop.permute.xlu0 %1214
    %v1218 = vmul.f32 %v1170, %v1213
    %v1219 = vmul.f32 %v1171, %v1215
    %1222 = vrot.lane.b32.xlu0 %v1218, 5
    %v1223 = vpop.permute.xlu0 %1222
    %1224 = vrot.lane.b32.xlu0 %v1219, 5
    %v1225 = vpop.permute.xlu0 %1224
    %v1228 = vsub.f32 %v34, %v1223
    %v1229 = vsub.f32 %v35, %v1225
    %1230 = vset.pattern.permute.xlu0 1
    %1231 = vperm.xlu0 %1230, %v1208
    %v1232 = vpop.permute.xlu0 %1231
    %1234 = vset.pattern.permute.xlu0 1
    %1235 = vperm.xlu0 %1234, %v1209
    %v1236 = vpop.permute.xlu0 %1235
    %v1238 = vmul.f32 %v868, %v1232
    %v1239 = vmul.f32 %v870, %v1236
    %1241 = vset.pattern.permute.xlu0 5
    %1242 = vperm.xlu0 %1241, %v1228
    %v1243 = vpop.permute.xlu0 %1242
    %1246 = vset.pattern.permute.xlu0 5
    %1247 = vperm.xlu0 %1246, %v1229
    %v1248 = vpop.permute.xlu0 %1247
    %v1250 = vadd.f32 %v1238, %v1243
    %v1251 = vadd.f32 %v1239, %v1248
    %v1252 = vxor.u32 %v1250, 2147483648
    %v1253 = vxor.u32 %v1251, 2147483648
    %v1254 = vmul.f32 %v1252, 1.442695
    %v1255 = vpow.pop %v1254
    %v1256 = vmul.f32 %v1253, 1.442695
    %v1257 = vpow.pop %v1256
    %v1258 = vadd.f32 %v1255, 1.0
    %v1259 = vadd.f32 %v1257, 1.0
    %v1260 = vrcp.pop %v1258
    %v1261 = vmul.f32 %v1258, %v1260
    %v1262 = vsub.f32 1.0, %v1261
    %v1263 = vmul.f32 %v1260, %v1262
    %v1264 = vadd.f32 %v1260, %v1263
    %vm1265 = vweird.f32 %v1258
    %vm1266 = vweird.f32 %v1260
    %vm1267 = vmor %vm1265, %vm1266
    %v1268 = vsel %vm1267, %v1260, %v1264
    %v1269 = vand.u32 2147483647, %v1258
    %vm1270 = vcmp.eq.f32.partialorder %v1269, 8.507059e+37
    %v1271 = vand.u32 %v1258, 2147483648
    %v1272 = vor.u32 1.1754944e-38, %v1271
    %v1273 = vsel %vm1270, %v1272, %v1268
    %v1274 = vmul.f32 1.0, %v1273
    %v1275 = vrcp.pop %v1259
    %v1276 = vmul.f32 %v1259, %v1275
    %v1277 = vsub.f32 1.0, %v1276
    %v1278 = vmul.f32 %v1275, %v1277
    %v1279 = vadd.f32 %v1275, %v1278
    %vm1280 = vweird.f32 %v1259
    %vm1281 = vweird.f32 %v1275
    %vm1282 = vmor %vm1280, %vm1281
    %v1283 = vsel %vm1282, %v1275, %v1279
    %v1284 = vand.u32 2147483647, %v1259
    %vm1285 = vcmp.eq.f32.partialorder %v1284, 8.507059e+37
    %v1286 = vand.u32 %v1259, 2147483648
    %v1287 = vor.u32 1.1754944e-38, %v1286
    %v1288 = vsel %vm1285, %v1287, %v1283
    %v1289 = vmul.f32 1.0, %v1288
    %v1290 = vmul.f32 %v1250, %v1274
    %v1291 = vmul.f32 %v1251, %v1289
    %v1292 = vunpack.c.l.bf16 %v1114
    %v1293 = vperm.slane %v1292, 0
    %v1294 = vmul.f32 %v1290, %v1293
    %v1295 = vmul.f32 %v1291, %v1293
    %v1296 = vadd.f32 %v1294, %v919
    %v1297 = vadd.f32 %v1295, %v921
    %v1298 = vpack.c.bf16 %v1296, %v1296
    %v1299 = vpack.c.bf16 %v1297, %v1297
    %s1300 = scalar_lea.vmem [#allocation2], 8
    %1301 = vst [vmem:[%s1300] sm:$0xf] %v1298
    %1302 = vst [vmem:[%s1300 + $0x4] sm:$0xf] %v1299
    // Predicated region
    $region38: #{tpu_custom_call.1} parent=1 // pred_check
      _
    $region39: #{tpu_custom_call.1} parent=1 // pred_check_branch
      %1304 = sbr.rel (0) target = $region41
    $region40: #{tpu_custom_call.1} parent=1 // pred_region
      %1306 = vsyncadd [#allocation3], 0
      %s1307 = sshll.u32 [#allocation2], 4
      %s1308 = int_to_ptr.vmem [resolvable:$true] %s1307
      %s1309 = sshll.u32 %s9, 4
      %s1310 = int_to_ptr.hbm [resolvable:$true] %s1309
      %1315 = dma.vmem_to_hbm [thread:$0]  %s1308, 256, %s1310, [#allocation3], 64, 64, 4
    $region41: #{tpu_custom_call.1} parent=1 // pred_fallthru
      _
    // Predicated region
    $region42: #{tpu_custom_call.1} parent=1 // pred_check
      _
    $region43: #{tpu_custom_call.1} parent=1 // pred_check_branch
      %1317 = sbr.rel (0) target = $region45
    $region44: #{tpu_custom_call.1} parent=1 // pred_region
      %1319 = dma.done [#allocation3], 256
    $region45: #{tpu_custom_call.1} parent=1 // pred_fallthru
      _
    %1320 = vsyncpa [#allocation3], 1

</llo_original>
